<compile_context>
chip_gen: v5e
topology: v5e:2x2
jax: 0.10.0
libtpu: 0.0.40
codegen_flags: <defaults>
</compile_context>

<pallas_src>
import functools

import jax
import jax.numpy as jnp
from jax.experimental import pallas as pl
from jax.experimental.pallas import tpu as pltpu

LEAKY_SLOPE = 0.2
BN_EPS = 1e-5


# ----------------------------- Pallas kernels ------------------------------

def _conv_kernel(s_ref, w_ref, o_ref, st_ref, *, Ho, Wo, Cp):
    """LeakyReLU + 4x4/stride-2 conv (4 shifted matmuls) + per-image BN partial sums.

      s_ref : (1, Ho+1, Wo+1, 4*Cin)  bf16   space-to-depth padded input (one image)
      w_ref : (4, 4*Cin, Cp)          bf16   weights; leading axis = (dy, dx) shift
      o_ref : (1, Ho*Wo, Cp)          f32    conv output (lane-dense, Cout padded)
      st_ref: (1, 2, Cp)              f32    [sum, sum_of_squares] over this image
    """
    s = s_ref[0]                                      # (Ho+1, Wo+1, 4*Cin)
    s = jnp.where(s > 0, s, s * LEAKY_SLOPE)          # fused LeakyReLU (leaky(0)=0)

    # Hoist the 4 weight sub-blocks out of the row loop.
    wk = [w_ref[i] for i in range(4)]                 # each (4*Cin, Cp) bf16

    shifts = ((0, 0), (0, 1), (1, 0), (1, 1))
    rows = []
    ssum = jnp.zeros((1, Cp), jnp.float32)
    ssq = jnp.zeros((1, Cp), jnp.float32)
    for oh in range(Ho):                              # static unroll; all ops stay 2-D
        racc = jnp.zeros((Wo, Cp), jnp.float32)
        for idx, (da, db) in enumerate(shifts):
            sub = s[oh + da, db:db + Wo, :]           # (Wo, 4*Cin) bf16, static slice
            racc = racc + jnp.dot(sub, wk[idx],
                                  preferred_element_type=jnp.float32)
        rows.append(racc)
        ssum = ssum + jnp.sum(racc, axis=0, keepdims=True)
        ssq = ssq + jnp.sum(racc * racc, axis=0, keepdims=True)

    o_ref[0] = jnp.concatenate(rows, axis=0)          # one dense (Ho*Wo, Cp) store
    st_ref[0, 0:1, :] = ssum
    st_ref[0, 1:2, :] = ssq


def _bn_apply_kernel(y_ref, scale_ref, shift_ref, o_ref):
    """y * scale + shift on a lane-dense (1, Ho*Wo, Cp) block."""
    o_ref[...] = y_ref[...] * scale_ref[...] + shift_ref[...]


# -------------------------------- wrapper -----------------------------------

def downblock_forward(x, weight, gamma, beta):
    """x: (N, Cin, H, W) f32.  weight: (Cout, Cin, 4, 4) f32.  Returns NCHW f32."""
    N, Cin, H, W = x.shape
    Cout = weight.shape[0]
    assert H % 2 == 0 and W % 2 == 0, "spatial dims must be even for k=4,s=2,p=1"
    Ho, Wo = H // 2, W // 2
    Ha, Wa = Ho + 1, Wo + 1
    K4 = 4 * Cin
    HoWo = Ho * Wo
    Cp = ((Cout + 127) // 128) * 128                  # lane-dense output channels

    # ---- input: NCHW -> padded NHWC -> space-to-depth (no duplication), bf16 ----
    x_nhwc = jnp.transpose(x, (0, 2, 3, 1)).astype(jnp.bfloat16)
    xp = jnp.pad(x_nhwc, ((0, 0), (1, 1), (1, 1), (0, 0)))
    # s2d[n, a, b, r*2*Cin + c*Cin + ci] = xp[n, 2a+r, 2b+c, ci]
    s2d = xp.reshape(N, Ha, 2, Wa, 2, Cin)
    s2d = s2d.transpose(0, 1, 3, 2, 4, 5).reshape(N, Ha, Wa, K4)

    # ---- weight: (Cout, Cin, 4, 4) -> (4 shifts, 4*Cin, Cp) bf16 ----------------
    w6 = weight.reshape(Cout, Cin, 2, 2, 2, 2)        # (co, ci, da, r, db, c)
    w6 = jnp.transpose(w6, (2, 4, 3, 5, 1, 0))        # (da, db, r, c, ci, co)
    w4 = w6.reshape(4, K4, Cout)
    w4 = jnp.pad(w4, ((0, 0), (0, 0), (0, Cp - Cout))).astype(jnp.bfloat16)

    # ---- pass 1: fused LeakyReLU + conv + per-image BN partial sums -------------
    conv_kernel = functools.partial(_conv_kernel, Ho=Ho, Wo=Wo, Cp=Cp)
    conv_out, stats = pl.pallas_call(
        conv_kernel,
        out_shape=(jax.ShapeDtypeStruct((N, HoWo, Cp), jnp.float32),
                   jax.ShapeDtypeStruct((N, 2, Cp), jnp.float32)),
        grid_spec=pltpu.PrefetchScalarGridSpec(
            num_scalar_prefetch=0,
            grid=(N,),
            in_specs=[
                pl.BlockSpec((1, Ha, Wa, K4), lambda n: (n, 0, 0, 0)),
                # Constant weight block, re-used every grid step.
                # TODO(synk): pipeline_mode=pl.Buffered(1) would reclaim the second
                # (redundant) weight buffer for very large Cin*Cout.
                pl.BlockSpec((4, K4, Cp), lambda n: (0, 0, 0)),
            ],
            out_specs=[
                pl.BlockSpec((1, HoWo, Cp), lambda n: (n, 0, 0)),
                pl.BlockSpec((1, 2, Cp), lambda n: (n, 0, 0)),
            ],
        ),
        compiler_params=pltpu.CompilerParams(dimension_semantics=("parallel",)),
    )(s2d, w4)

    # ---- tiny per-channel stats -> affine scale/shift (train-mode BatchNorm) ----
    cnt = jnp.float32(N * HoWo)
    mean = jnp.sum(stats[:, 0, :], axis=0) / cnt
    var = jnp.maximum(jnp.sum(stats[:, 1, :], axis=0) / cnt - mean * mean, 0.0)
    inv = jax.lax.rsqrt(var + BN_EPS)
    gamma_p = jnp.pad(gamma.astype(jnp.float32), (0, Cp - Cout))
    beta_p = jnp.pad(beta.astype(jnp.float32), (0, Cp - Cout))
    scale = (gamma_p * inv).reshape(1, Cp)
    shift = (beta_p - mean * gamma_p * inv).reshape(1, Cp)
    # TODO(synk): PyTorch BatchNorm2d also updates running_mean/running_var buffers
    # (momentum, unbiased variance); those stateful buffers are not returned here.

    # ---- pass 2: apply BN affine, tiled & lane-dense -----------------------------
    y = pl.pallas_call(
        _bn_apply_kernel,
        out_shape=jax.ShapeDtypeStruct((N, HoWo, Cp), jnp.float32),
        grid_spec=pltpu.PrefetchScalarGridSpec(
            num_scalar_prefetch=0,
            grid=(N,),
            in_specs=[
                pl.BlockSpec((1, HoWo, Cp), lambda n: (n, 0, 0)),
                pl.BlockSpec((1, Cp), lambda n: (0, 0)),
                pl.BlockSpec((1, Cp), lambda n: (0, 0)),
            ],
            out_specs=pl.BlockSpec((1, HoWo, Cp), lambda n: (n, 0, 0)),
        ),
        compiler_params=pltpu.CompilerParams(dimension_semantics=("parallel",)),
    )(conv_out, scale, shift)

    # Drop channel padding, back to NCHW (PyTorch contract).  A consumer that can
    # take NHWC directly could skip this final transpose.
    return y[:, :, :Cout].reshape(N, Ho, Wo, Cout).transpose(0, 3, 1, 2)


# ---------------------------- reference (for check) --------------------------

def _reference(x, weight, gamma, beta):
    xr = jnp.where(x > 0, x, LEAKY_SLOPE * x)
    conv = jax.lax.conv_general_dilated(
        xr, weight, window_strides=(2, 2), padding=[(1, 1), (1, 1)],
        dimension_numbers=("NCHW", "OIHW", "NCHW"))
    mean = jnp.mean(conv, axis=(0, 2, 3), keepdims=True)
    var = jnp.mean((conv - mean) ** 2, axis=(0, 2, 3), keepdims=True)
    inv = jax.lax.rsqrt(var + BN_EPS)
    g = gamma.reshape(1, -1, 1, 1)
    b = beta.reshape(1, -1, 1, 1)
    return (conv - mean) * inv * g + b


if __name__ == "__main__":
    key = jax.random.PRNGKey(0)
    kx, kw = jax.random.split(key)

    N, Cin, H, W = 2, 4, 16, 16
    Cout = 8

    x = jax.random.normal(kx, (N, Cin, H, W), dtype=jnp.float32)
    weight = 0.05 * jax.random.normal(kw, (Cout, Cin, 4, 4), dtype=jnp.float32)
    gamma = jnp.ones((Cout,), dtype=jnp.float32)      # nn.BatchNorm2d init
    beta = jnp.zeros((Cout,), dtype=jnp.float32)

    fwd = jax.jit(downblock_forward)
    out = jax.block_until_ready(fwd(x, weight, gamma, beta))

    ref = _reference(x, weight, gamma, beta)
    assert out.shape == (N, Cout, H // 2, W // 2), out.shape
    # bf16 MXU inputs (f32 accumulation) => tolerance loosened vs the f32 reference.
    max_err = float(jnp.max(jnp.abs(out - ref)))
    assert jnp.allclose(out, ref, rtol=5e-2, atol=5e-2), max_err

    print("KERNEL_OK")
</pallas_src>

<mosaic_0001>
module attributes {stable_mosaic.version = 11 : i64} {
  func.func @_conv_kernel(%arg0: i32, %arg1: memref<1x9x9x16xbf16, #tpu.memory_space<vmem>>, %arg2: memref<4x16x128xbf16, #tpu.memory_space<vmem>>, %arg3: memref<1x64x128xf32, #tpu.memory_space<vmem>>, %arg4: memref<1x2x128xf32, #tpu.memory_space<vmem>>) attributes {dimension_semantics = [#tpu.dimension_semantics<parallel>], iteration_bounds = array<i64: 2>, scalar_prefetch = 0 : i64, scratch_operands = 0 : i64, tpu.core_type = #tpu.core_type<tc>, window_params = [{transform_indices = @transform_0, window_bounds = array<i64: 1, 9, 9, 16>}, {pipeline_mode = #tpu.pipeline_mode<synchronous>, transform_indices = @transform_1, window_bounds = array<i64: 4, 16, 128>}, {transform_indices = @transform_2, window_bounds = array<i64: 1, 64, 128>}, {transform_indices = @transform_3, window_bounds = array<i64: 1, 2, 128>}]} {
    %c0 = arith.constant 0 : index
    %c0_0 = arith.constant 0 : index
    %c0_1 = arith.constant 0 : index
    %c0_2 = arith.constant 0 : index
    %0 = vector.load %arg1[%c0, %c0_0, %c0_1, %c0_2] : memref<1x9x9x16xbf16, #tpu.memory_space<vmem>>, vector<1x9x9x16xbf16>
    %1 = vector.shape_cast %0 : vector<1x9x9x16xbf16> to vector<9x9x16xbf16>
    %cst = arith.constant 0.000000e+00 : bf16
    %2 = vector.broadcast %cst : bf16 to vector<9x9x16xbf16>
    %3 = arith.cmpf ogt, %1, %2 : vector<9x9x16xbf16>
    %cst_3 = arith.constant 2.001950e-01 : bf16
    %4 = vector.broadcast %cst_3 : bf16 to vector<9x9x16xbf16>
    %5 = arith.mulf %1, %4 : vector<9x9x16xbf16>
    %6 = arith.select %3, %1, %5 : vector<9x9x16xi1>, vector<9x9x16xbf16>
    %c0_4 = arith.constant 0 : index
    %c0_5 = arith.constant 0 : index
    %c0_6 = arith.constant 0 : index
    %7 = vector.load %arg2[%c0_4, %c0_5, %c0_6] : memref<4x16x128xbf16, #tpu.memory_space<vmem>>, vector<1x16x128xbf16>
    %8 = vector.shape_cast %7 : vector<1x16x128xbf16> to vector<16x128xbf16>
    %c1 = arith.constant 1 : index
    %c0_7 = arith.constant 0 : index
    %c0_8 = arith.constant 0 : index
    %9 = vector.load %arg2[%c1, %c0_7, %c0_8] : memref<4x16x128xbf16, #tpu.memory_space<vmem>>, vector<1x16x128xbf16>
    %10 = vector.shape_cast %9 : vector<1x16x128xbf16> to vector<16x128xbf16>
    %c2 = arith.constant 2 : index
    %c0_9 = arith.constant 0 : index
    %c0_10 = arith.constant 0 : index
    %11 = vector.load %arg2[%c2, %c0_9, %c0_10] : memref<4x16x128xbf16, #tpu.memory_space<vmem>>, vector<1x16x128xbf16>
    %12 = vector.shape_cast %11 : vector<1x16x128xbf16> to vector<16x128xbf16>
    %c3 = arith.constant 3 : index
    %c0_11 = arith.constant 0 : index
    %c0_12 = arith.constant 0 : index
    %13 = vector.load %arg2[%c3, %c0_11, %c0_12] : memref<4x16x128xbf16, #tpu.memory_space<vmem>>, vector<1x16x128xbf16>
    %14 = vector.shape_cast %13 : vector<1x16x128xbf16> to vector<16x128xbf16>
    %cst_13 = arith.constant 0.000000e+00 : f32
    %15 = vector.broadcast %cst_13 : f32 to vector<1x128xf32>
    %cst_14 = arith.constant 0.000000e+00 : f32
    %16 = vector.broadcast %cst_14 : f32 to vector<1x128xf32>
    %cst_15 = arith.constant 0.000000e+00 : f32
    %17 = vector.broadcast %cst_15 : f32 to vector<8x128xf32>
    %18 = vector.extract_strided_slice %6 {offsets = [0, 0, 0], sizes = [1, 8, 16], strides = [1, 1, 1]} : vector<9x9x16xbf16> to vector<1x8x16xbf16>
    %19 = vector.shape_cast %18 : vector<1x8x16xbf16> to vector<8x16xbf16>
    %cst_16 = arith.constant dense<0.000000e+00> : vector<8x128xf32>
    %20 = tpu.matmul %19, %8, %cst_16 {dimension_numbers = #tpu.dot_dimension_numbers<[1], [0], [0], [1], [0, 0, 1, 1], [], []>} : vector<8x16xbf16>, vector<16x128xbf16>, vector<8x128xf32> -> vector<8x128xf32>
    %21 = arith.addf %17, %20 : vector<8x128xf32>
    %22 = vector.extract_strided_slice %6 {offsets = [0, 1, 0], sizes = [1, 8, 16], strides = [1, 1, 1]} : vector<9x9x16xbf16> to vector<1x8x16xbf16>
    %23 = vector.shape_cast %22 : vector<1x8x16xbf16> to vector<8x16xbf16>
    %cst_17 = arith.constant dense<0.000000e+00> : vector<8x128xf32>
    %24 = tpu.matmul %23, %10, %cst_17 {dimension_numbers = #tpu.dot_dimension_numbers<[1], [0], [0], [1], [0, 0, 1, 1], [], []>} : vector<8x16xbf16>, vector<16x128xbf16>, vector<8x128xf32> -> vector<8x128xf32>
    %25 = arith.addf %21, %24 : vector<8x128xf32>
    %26 = vector.extract_strided_slice %6 {offsets = [1, 0, 0], sizes = [1, 8, 16], strides = [1, 1, 1]} : vector<9x9x16xbf16> to vector<1x8x16xbf16>
    %27 = vector.shape_cast %26 : vector<1x8x16xbf16> to vector<8x16xbf16>
    %cst_18 = arith.constant dense<0.000000e+00> : vector<8x128xf32>
    %28 = tpu.matmul %27, %12, %cst_18 {dimension_numbers = #tpu.dot_dimension_numbers<[1], [0], [0], [1], [0, 0, 1, 1], [], []>} : vector<8x16xbf16>, vector<16x128xbf16>, vector<8x128xf32> -> vector<8x128xf32>
    %29 = arith.addf %25, %28 : vector<8x128xf32>
    %30 = vector.extract_strided_slice %6 {offsets = [1, 1, 0], sizes = [1, 8, 16], strides = [1, 1, 1]} : vector<9x9x16xbf16> to vector<1x8x16xbf16>
    %31 = vector.shape_cast %30 : vector<1x8x16xbf16> to vector<8x16xbf16>
    %cst_19 = arith.constant dense<0.000000e+00> : vector<8x128xf32>
    %32 = tpu.matmul %31, %14, %cst_19 {dimension_numbers = #tpu.dot_dimension_numbers<[1], [0], [0], [1], [0, 0, 1, 1], [], []>} : vector<8x16xbf16>, vector<16x128xbf16>, vector<8x128xf32> -> vector<8x128xf32>
    %33 = arith.addf %29, %32 : vector<8x128xf32>
    %cst_20 = arith.constant dense<0.000000e+00> : vector<128xf32>
    %34 = vector.multi_reduction <add>, %33, %cst_20 [0] : vector<8x128xf32> to vector<128xf32>
    %35 = vector.shape_cast %34 : vector<128xf32> to vector<1x128xf32>
    %36 = arith.addf %15, %35 : vector<1x128xf32>
    %37 = arith.mulf %33, %33 : vector<8x128xf32>
    %cst_21 = arith.constant dense<0.000000e+00> : vector<128xf32>
    %38 = vector.multi_reduction <add>, %37, %cst_21 [0] : vector<8x128xf32> to vector<128xf32>
    %39 = vector.shape_cast %38 : vector<128xf32> to vector<1x128xf32>
    %40 = arith.addf %16, %39 : vector<1x128xf32>
    %cst_22 = arith.constant 0.000000e+00 : f32
    %41 = vector.broadcast %cst_22 : f32 to vector<8x128xf32>
    %42 = vector.extract_strided_slice %6 {offsets = [1, 0, 0], sizes = [1, 8, 16], strides = [1, 1, 1]} : vector<9x9x16xbf16> to vector<1x8x16xbf16>
    %43 = vector.shape_cast %42 : vector<1x8x16xbf16> to vector<8x16xbf16>
    %cst_23 = arith.constant dense<0.000000e+00> : vector<8x128xf32>
    %44 = tpu.matmul %43, %8, %cst_23 {dimension_numbers = #tpu.dot_dimension_numbers<[1], [0], [0], [1], [0, 0, 1, 1], [], []>} : vector<8x16xbf16>, vector<16x128xbf16>, vector<8x128xf32> -> vector<8x128xf32>
    %45 = arith.addf %41, %44 : vector<8x128xf32>
    %46 = vector.extract_strided_slice %6 {offsets = [1, 1, 0], sizes = [1, 8, 16], strides = [1, 1, 1]} : vector<9x9x16xbf16> to vector<1x8x16xbf16>
    %47 = vector.shape_cast %46 : vector<1x8x16xbf16> to vector<8x16xbf16>
    %cst_24 = arith.constant dense<0.000000e+00> : vector<8x128xf32>
    %48 = tpu.matmul %47, %10, %cst_24 {dimension_numbers = #tpu.dot_dimension_numbers<[1], [0], [0], [1], [0, 0, 1, 1], [], []>} : vector<8x16xbf16>, vector<16x128xbf16>, vector<8x128xf32> -> vector<8x128xf32>
    %49 = arith.addf %45, %48 : vector<8x128xf32>
    %50 = vector.extract_strided_slice %6 {offsets = [2, 0, 0], sizes = [1, 8, 16], strides = [1, 1, 1]} : vector<9x9x16xbf16> to vector<1x8x16xbf16>
    %51 = vector.shape_cast %50 : vector<1x8x16xbf16> to vector<8x16xbf16>
    %cst_25 = arith.constant dense<0.000000e+00> : vector<8x128xf32>
    %52 = tpu.matmul %51, %12, %cst_25 {dimension_numbers = #tpu.dot_dimension_numbers<[1], [0], [0], [1], [0, 0, 1, 1], [], []>} : vector<8x16xbf16>, vector<16x128xbf16>, vector<8x128xf32> -> vector<8x128xf32>
    %53 = arith.addf %49, %52 : vector<8x128xf32>
    %54 = vector.extract_strided_slice %6 {offsets = [2, 1, 0], sizes = [1, 8, 16], strides = [1, 1, 1]} : vector<9x9x16xbf16> to vector<1x8x16xbf16>
    %55 = vector.shape_cast %54 : vector<1x8x16xbf16> to vector<8x16xbf16>
    %cst_26 = arith.constant dense<0.000000e+00> : vector<8x128xf32>
    %56 = tpu.matmul %55, %14, %cst_26 {dimension_numbers = #tpu.dot_dimension_numbers<[1], [0], [0], [1], [0, 0, 1, 1], [], []>} : vector<8x16xbf16>, vector<16x128xbf16>, vector<8x128xf32> -> vector<8x128xf32>
    %57 = arith.addf %53, %56 : vector<8x128xf32>
    %cst_27 = arith.constant dense<0.000000e+00> : vector<128xf32>
    %58 = vector.multi_reduction <add>, %57, %cst_27 [0] : vector<8x128xf32> to vector<128xf32>
    %59 = vector.shape_cast %58 : vector<128xf32> to vector<1x128xf32>
    %60 = arith.addf %36, %59 : vector<1x128xf32>
    %61 = arith.mulf %57, %57 : vector<8x128xf32>
    %cst_28 = arith.constant dense<0.000000e+00> : vector<128xf32>
    %62 = vector.multi_reduction <add>, %61, %cst_28 [0] : vector<8x128xf32> to vector<128xf32>
    %63 = vector.shape_cast %62 : vector<128xf32> to vector<1x128xf32>
    %64 = arith.addf %40, %63 : vector<1x128xf32>
    %cst_29 = arith.constant 0.000000e+00 : f32
    %65 = vector.broadcast %cst_29 : f32 to vector<8x128xf32>
    %66 = vector.extract_strided_slice %6 {offsets = [2, 0, 0], sizes = [1, 8, 16], strides = [1, 1, 1]} : vector<9x9x16xbf16> to vector<1x8x16xbf16>
    %67 = vector.shape_cast %66 : vector<1x8x16xbf16> to vector<8x16xbf16>
    %cst_30 = arith.constant dense<0.000000e+00> : vector<8x128xf32>
    %68 = tpu.matmul %67, %8, %cst_30 {dimension_numbers = #tpu.dot_dimension_numbers<[1], [0], [0], [1], [0, 0, 1, 1], [], []>} : vector<8x16xbf16>, vector<16x128xbf16>, vector<8x128xf32> -> vector<8x128xf32>
    %69 = arith.addf %65, %68 : vector<8x128xf32>
    %70 = vector.extract_strided_slice %6 {offsets = [2, 1, 0], sizes = [1, 8, 16], strides = [1, 1, 1]} : vector<9x9x16xbf16> to vector<1x8x16xbf16>
    %71 = vector.shape_cast %70 : vector<1x8x16xbf16> to vector<8x16xbf16>
    %cst_31 = arith.constant dense<0.000000e+00> : vector<8x128xf32>
    %72 = tpu.matmul %71, %10, %cst_31 {dimension_numbers = #tpu.dot_dimension_numbers<[1], [0], [0], [1], [0, 0, 1, 1], [], []>} : vector<8x16xbf16>, vector<16x128xbf16>, vector<8x128xf32> -> vector<8x128xf32>
    %73 = arith.addf %69, %72 : vector<8x128xf32>
    %74 = vector.extract_strided_slice %6 {offsets = [3, 0, 0], sizes = [1, 8, 16], strides = [1, 1, 1]} : vector<9x9x16xbf16> to vector<1x8x16xbf16>
    %75 = vector.shape_cast %74 : vector<1x8x16xbf16> to vector<8x16xbf16>
    %cst_32 = arith.constant dense<0.000000e+00> : vector<8x128xf32>
    %76 = tpu.matmul %75, %12, %cst_32 {dimension_numbers = #tpu.dot_dimension_numbers<[1], [0], [0], [1], [0, 0, 1, 1], [], []>} : vector<8x16xbf16>, vector<16x128xbf16>, vector<8x128xf32> -> vector<8x128xf32>
    %77 = arith.addf %73, %76 : vector<8x128xf32>
    %78 = vector.extract_strided_slice %6 {offsets = [3, 1, 0], sizes = [1, 8, 16], strides = [1, 1, 1]} : vector<9x9x16xbf16> to vector<1x8x16xbf16>
    %79 = vector.shape_cast %78 : vector<1x8x16xbf16> to vector<8x16xbf16>
    %cst_33 = arith.constant dense<0.000000e+00> : vector<8x128xf32>
    %80 = tpu.matmul %79, %14, %cst_33 {dimension_numbers = #tpu.dot_dimension_numbers<[1], [0], [0], [1], [0, 0, 1, 1], [], []>} : vector<8x16xbf16>, vector<16x128xbf16>, vector<8x128xf32> -> vector<8x128xf32>
    %81 = arith.addf %77, %80 : vector<8x128xf32>
    %cst_34 = arith.constant dense<0.000000e+00> : vector<128xf32>
    %82 = vector.multi_reduction <add>, %81, %cst_34 [0] : vector<8x128xf32> to vector<128xf32>
    %83 = vector.shape_cast %82 : vector<128xf32> to vector<1x128xf32>
    %84 = arith.addf %60, %83 : vector<1x128xf32>
    %85 = arith.mulf %81, %81 : vector<8x128xf32>
    %cst_35 = arith.constant dense<0.000000e+00> : vector<128xf32>
    %86 = vector.multi_reduction <add>, %85, %cst_35 [0] : vector<8x128xf32> to vector<128xf32>
    %87 = vector.shape_cast %86 : vector<128xf32> to vector<1x128xf32>
    %88 = arith.addf %64, %87 : vector<1x128xf32>
    %cst_36 = arith.constant 0.000000e+00 : f32
    %89 = vector.broadcast %cst_36 : f32 to vector<8x128xf32>
    %90 = vector.extract_strided_slice %6 {offsets = [3, 0, 0], sizes = [1, 8, 16], strides = [1, 1, 1]} : vector<9x9x16xbf16> to vector<1x8x16xbf16>
    %91 = vector.shape_cast %90 : vector<1x8x16xbf16> to vector<8x16xbf16>
    %cst_37 = arith.constant dense<0.000000e+00> : vector<8x128xf32>
    %92 = tpu.matmul %91, %8, %cst_37 {dimension_numbers = #tpu.dot_dimension_numbers<[1], [0], [0], [1], [0, 0, 1, 1], [], []>} : vector<8x16xbf16>, vector<16x128xbf16>, vector<8x128xf32> -> vector<8x128xf32>
    %93 = arith.addf %89, %92 : vector<8x128xf32>
    %94 = vector.extract_strided_slice %6 {offsets = [3, 1, 0], sizes = [1, 8, 16], strides = [1, 1, 1]} : vector<9x9x16xbf16> to vector<1x8x16xbf16>
    %95 = vector.shape_cast %94 : vector<1x8x16xbf16> to vector<8x16xbf16>
    %cst_38 = arith.constant dense<0.000000e+00> : vector<8x128xf32>
    %96 = tpu.matmul %95, %10, %cst_38 {dimension_numbers = #tpu.dot_dimension_numbers<[1], [0], [0], [1], [0, 0, 1, 1], [], []>} : vector<8x16xbf16>, vector<16x128xbf16>, vector<8x128xf32> -> vector<8x128xf32>
    %97 = arith.addf %93, %96 : vector<8x128xf32>
    %98 = vector.extract_strided_slice %6 {offsets = [4, 0, 0], sizes = [1, 8, 16], strides = [1, 1, 1]} : vector<9x9x16xbf16> to vector<1x8x16xbf16>
    %99 = vector.shape_cast %98 : vector<1x8x16xbf16> to vector<8x16xbf16>
    %cst_39 = arith.constant dense<0.000000e+00> : vector<8x128xf32>
    %100 = tpu.matmul %99, %12, %cst_39 {dimension_numbers = #tpu.dot_dimension_numbers<[1], [0], [0], [1], [0, 0, 1, 1], [], []>} : vector<8x16xbf16>, vector<16x128xbf16>, vector<8x128xf32> -> vector<8x128xf32>
    %101 = arith.addf %97, %100 : vector<8x128xf32>
    %102 = vector.extract_strided_slice %6 {offsets = [4, 1, 0], sizes = [1, 8, 16], strides = [1, 1, 1]} : vector<9x9x16xbf16> to vector<1x8x16xbf16>
    %103 = vector.shape_cast %102 : vector<1x8x16xbf16> to vector<8x16xbf16>
    %cst_40 = arith.constant dense<0.000000e+00> : vector<8x128xf32>
    %104 = tpu.matmul %103, %14, %cst_40 {dimension_numbers = #tpu.dot_dimension_numbers<[1], [0], [0], [1], [0, 0, 1, 1], [], []>} : vector<8x16xbf16>, vector<16x128xbf16>, vector<8x128xf32> -> vector<8x128xf32>
    %105 = arith.addf %101, %104 : vector<8x128xf32>
    %cst_41 = arith.constant dense<0.000000e+00> : vector<128xf32>
    %106 = vector.multi_reduction <add>, %105, %cst_41 [0] : vector<8x128xf32> to vector<128xf32>
    %107 = vector.shape_cast %106 : vector<128xf32> to vector<1x128xf32>
    %108 = arith.addf %84, %107 : vector<1x128xf32>
    %109 = arith.mulf %105, %105 : vector<8x128xf32>
    %cst_42 = arith.constant dense<0.000000e+00> : vector<128xf32>
    %110 = vector.multi_reduction <add>, %109, %cst_42 [0] : vector<8x128xf32> to vector<128xf32>
    %111 = vector.shape_cast %110 : vector<128xf32> to vector<1x128xf32>
    %112 = arith.addf %88, %111 : vector<1x128xf32>
    %cst_43 = arith.constant 0.000000e+00 : f32
    %113 = vector.broadcast %cst_43 : f32 to vector<8x128xf32>
    %114 = vector.extract_strided_slice %6 {offsets = [4, 0, 0], sizes = [1, 8, 16], strides = [1, 1, 1]} : vector<9x9x16xbf16> to vector<1x8x16xbf16>
    %115 = vector.shape_cast %114 : vector<1x8x16xbf16> to vector<8x16xbf16>
    %cst_44 = arith.constant dense<0.000000e+00> : vector<8x128xf32>
    %116 = tpu.matmul %115, %8, %cst_44 {dimension_numbers = #tpu.dot_dimension_numbers<[1], [0], [0], [1], [0, 0, 1, 1], [], []>} : vector<8x16xbf16>, vector<16x128xbf16>, vector<8x128xf32> -> vector<8x128xf32>
    %117 = arith.addf %113, %116 : vector<8x128xf32>
    %118 = vector.extract_strided_slice %6 {offsets = [4, 1, 0], sizes = [1, 8, 16], strides = [1, 1, 1]} : vector<9x9x16xbf16> to vector<1x8x16xbf16>
    %119 = vector.shape_cast %118 : vector<1x8x16xbf16> to vector<8x16xbf16>
    %cst_45 = arith.constant dense<0.000000e+00> : vector<8x128xf32>
    %120 = tpu.matmul %119, %10, %cst_45 {dimension_numbers = #tpu.dot_dimension_numbers<[1], [0], [0], [1], [0, 0, 1, 1], [], []>} : vector<8x16xbf16>, vector<16x128xbf16>, vector<8x128xf32> -> vector<8x128xf32>
    %121 = arith.addf %117, %120 : vector<8x128xf32>
    %122 = vector.extract_strided_slice %6 {offsets = [5, 0, 0], sizes = [1, 8, 16], strides = [1, 1, 1]} : vector<9x9x16xbf16> to vector<1x8x16xbf16>
    %123 = vector.shape_cast %122 : vector<1x8x16xbf16> to vector<8x16xbf16>
    %cst_46 = arith.constant dense<0.000000e+00> : vector<8x128xf32>
    %124 = tpu.matmul %123, %12, %cst_46 {dimension_numbers = #tpu.dot_dimension_numbers<[1], [0], [0], [1], [0, 0, 1, 1], [], []>} : vector<8x16xbf16>, vector<16x128xbf16>, vector<8x128xf32> -> vector<8x128xf32>
    %125 = arith.addf %121, %124 : vector<8x128xf32>
    %126 = vector.extract_strided_slice %6 {offsets = [5, 1, 0], sizes = [1, 8, 16], strides = [1, 1, 1]} : vector<9x9x16xbf16> to vector<1x8x16xbf16>
    %127 = vector.shape_cast %126 : vector<1x8x16xbf16> to vector<8x16xbf16>
    %cst_47 = arith.constant dense<0.000000e+00> : vector<8x128xf32>
    %128 = tpu.matmul %127, %14, %cst_47 {dimension_numbers = #tpu.dot_dimension_numbers<[1], [0], [0], [1], [0, 0, 1, 1], [], []>} : vector<8x16xbf16>, vector<16x128xbf16>, vector<8x128xf32> -> vector<8x128xf32>
    %129 = arith.addf %125, %128 : vector<8x128xf32>
    %cst_48 = arith.constant dense<0.000000e+00> : vector<128xf32>
    %130 = vector.multi_reduction <add>, %129, %cst_48 [0] : vector<8x128xf32> to vector<128xf32>
    %131 = vector.shape_cast %130 : vector<128xf32> to vector<1x128xf32>
    %132 = arith.addf %108, %131 : vector<1x128xf32>
    %133 = arith.mulf %129, %129 : vector<8x128xf32>
    %cst_49 = arith.constant dense<0.000000e+00> : vector<128xf32>
    %134 = vector.multi_reduction <add>, %133, %cst_49 [0] : vector<8x128xf32> to vector<128xf32>
    %135 = vector.shape_cast %134 : vector<128xf32> to vector<1x128xf32>
    %136 = arith.addf %112, %135 : vector<1x128xf32>
    %cst_50 = arith.constant 0.000000e+00 : f32
    %137 = vector.broadcast %cst_50 : f32 to vector<8x128xf32>
    %138 = vector.extract_strided_slice %6 {offsets = [5, 0, 0], sizes = [1, 8, 16], strides = [1, 1, 1]} : vector<9x9x16xbf16> to vector<1x8x16xbf16>
    %139 = vector.shape_cast %138 : vector<1x8x16xbf16> to vector<8x16xbf16>
    %cst_51 = arith.constant dense<0.000000e+00> : vector<8x128xf32>
    %140 = tpu.matmul %139, %8, %cst_51 {dimension_numbers = #tpu.dot_dimension_numbers<[1], [0], [0], [1], [0, 0, 1, 1], [], []>} : vector<8x16xbf16>, vector<16x128xbf16>, vector<8x128xf32> -> vector<8x128xf32>
    %141 = arith.addf %137, %140 : vector<8x128xf32>
    %142 = vector.extract_strided_slice %6 {offsets = [5, 1, 0], sizes = [1, 8, 16], strides = [1, 1, 1]} : vector<9x9x16xbf16> to vector<1x8x16xbf16>
    %143 = vector.shape_cast %142 : vector<1x8x16xbf16> to vector<8x16xbf16>
    %cst_52 = arith.constant dense<0.000000e+00> : vector<8x128xf32>
    %144 = tpu.matmul %143, %10, %cst_52 {dimension_numbers = #tpu.dot_dimension_numbers<[1], [0], [0], [1], [0, 0, 1, 1], [], []>} : vector<8x16xbf16>, vector<16x128xbf16>, vector<8x128xf32> -> vector<8x128xf32>
    %145 = arith.addf %141, %144 : vector<8x128xf32>
    %146 = vector.extract_strided_slice %6 {offsets = [6, 0, 0], sizes = [1, 8, 16], strides = [1, 1, 1]} : vector<9x9x16xbf16> to vector<1x8x16xbf16>
    %147 = vector.shape_cast %146 : vector<1x8x16xbf16> to vector<8x16xbf16>
    %cst_53 = arith.constant dense<0.000000e+00> : vector<8x128xf32>
    %148 = tpu.matmul %147, %12, %cst_53 {dimension_numbers = #tpu.dot_dimension_numbers<[1], [0], [0], [1], [0, 0, 1, 1], [], []>} : vector<8x16xbf16>, vector<16x128xbf16>, vector<8x128xf32> -> vector<8x128xf32>
    %149 = arith.addf %145, %148 : vector<8x128xf32>
    %150 = vector.extract_strided_slice %6 {offsets = [6, 1, 0], sizes = [1, 8, 16], strides = [1, 1, 1]} : vector<9x9x16xbf16> to vector<1x8x16xbf16>
    %151 = vector.shape_cast %150 : vector<1x8x16xbf16> to vector<8x16xbf16>
    %cst_54 = arith.constant dense<0.000000e+00> : vector<8x128xf32>
    %152 = tpu.matmul %151, %14, %cst_54 {dimension_numbers = #tpu.dot_dimension_numbers<[1], [0], [0], [1], [0, 0, 1, 1], [], []>} : vector<8x16xbf16>, vector<16x128xbf16>, vector<8x128xf32> -> vector<8x128xf32>
    %153 = arith.addf %149, %152 : vector<8x128xf32>
    %cst_55 = arith.constant dense<0.000000e+00> : vector<128xf32>
    %154 = vector.multi_reduction <add>, %153, %cst_55 [0] : vector<8x128xf32> to vector<128xf32>
    %155 = vector.shape_cast %154 : vector<128xf32> to vector<1x128xf32>
    %156 = arith.addf %132, %155 : vector<1x128xf32>
    %157 = arith.mulf %153, %153 : vector<8x128xf32>
    %cst_56 = arith.constant dense<0.000000e+00> : vector<128xf32>
    %158 = vector.multi_reduction <add>, %157, %cst_56 [0] : vector<8x128xf32> to vector<128xf32>
    %159 = vector.shape_cast %158 : vector<128xf32> to vector<1x128xf32>
    %160 = arith.addf %136, %159 : vector<1x128xf32>
    %cst_57 = arith.constant 0.000000e+00 : f32
    %161 = vector.broadcast %cst_57 : f32 to vector<8x128xf32>
    %162 = vector.extract_strided_slice %6 {offsets = [6, 0, 0], sizes = [1, 8, 16], strides = [1, 1, 1]} : vector<9x9x16xbf16> to vector<1x8x16xbf16>
    %163 = vector.shape_cast %162 : vector<1x8x16xbf16> to vector<8x16xbf16>
    %cst_58 = arith.constant dense<0.000000e+00> : vector<8x128xf32>
    %164 = tpu.matmul %163, %8, %cst_58 {dimension_numbers = #tpu.dot_dimension_numbers<[1], [0], [0], [1], [0, 0, 1, 1], [], []>} : vector<8x16xbf16>, vector<16x128xbf16>, vector<8x128xf32> -> vector<8x128xf32>
    %165 = arith.addf %161, %164 : vector<8x128xf32>
    %166 = vector.extract_strided_slice %6 {offsets = [6, 1, 0], sizes = [1, 8, 16], strides = [1, 1, 1]} : vector<9x9x16xbf16> to vector<1x8x16xbf16>
    %167 = vector.shape_cast %166 : vector<1x8x16xbf16> to vector<8x16xbf16>
    %cst_59 = arith.constant dense<0.000000e+00> : vector<8x128xf32>
    %168 = tpu.matmul %167, %10, %cst_59 {dimension_numbers = #tpu.dot_dimension_numbers<[1], [0], [0], [1], [0, 0, 1, 1], [], []>} : vector<8x16xbf16>, vector<16x128xbf16>, vector<8x128xf32> -> vector<8x128xf32>
    %169 = arith.addf %165, %168 : vector<8x128xf32>
    %170 = vector.extract_strided_slice %6 {offsets = [7, 0, 0], sizes = [1, 8, 16], strides = [1, 1, 1]} : vector<9x9x16xbf16> to vector<1x8x16xbf16>
    %171 = vector.shape_cast %170 : vector<1x8x16xbf16> to vector<8x16xbf16>
    %cst_60 = arith.constant dense<0.000000e+00> : vector<8x128xf32>
    %172 = tpu.matmul %171, %12, %cst_60 {dimension_numbers = #tpu.dot_dimension_numbers<[1], [0], [0], [1], [0, 0, 1, 1], [], []>} : vector<8x16xbf16>, vector<16x128xbf16>, vector<8x128xf32> -> vector<8x128xf32>
    %173 = arith.addf %169, %172 : vector<8x128xf32>
    %174 = vector.extract_strided_slice %6 {offsets = [7, 1, 0], sizes = [1, 8, 16], strides = [1, 1, 1]} : vector<9x9x16xbf16> to vector<1x8x16xbf16>
    %175 = vector.shape_cast %174 : vector<1x8x16xbf16> to vector<8x16xbf16>
    %cst_61 = arith.constant dense<0.000000e+00> : vector<8x128xf32>
    %176 = tpu.matmul %175, %14, %cst_61 {dimension_numbers = #tpu.dot_dimension_numbers<[1], [0], [0], [1], [0, 0, 1, 1], [], []>} : vector<8x16xbf16>, vector<16x128xbf16>, vector<8x128xf32> -> vector<8x128xf32>
    %177 = arith.addf %173, %176 : vector<8x128xf32>
    %cst_62 = arith.constant dense<0.000000e+00> : vector<128xf32>
    %178 = vector.multi_reduction <add>, %177, %cst_62 [0] : vector<8x128xf32> to vector<128xf32>
    %179 = vector.shape_cast %178 : vector<128xf32> to vector<1x128xf32>
    %180 = arith.addf %156, %179 : vector<1x128xf32>
    %181 = arith.mulf %177, %177 : vector<8x128xf32>
    %cst_63 = arith.constant dense<0.000000e+00> : vector<128xf32>
    %182 = vector.multi_reduction <add>, %181, %cst_63 [0] : vector<8x128xf32> to vector<128xf32>
    %183 = vector.shape_cast %182 : vector<128xf32> to vector<1x128xf32>
    %184 = arith.addf %160, %183 : vector<1x128xf32>
    %cst_64 = arith.constant 0.000000e+00 : f32
    %185 = vector.broadcast %cst_64 : f32 to vector<8x128xf32>
    %186 = vector.extract_strided_slice %6 {offsets = [7, 0, 0], sizes = [1, 8, 16], strides = [1, 1, 1]} : vector<9x9x16xbf16> to vector<1x8x16xbf16>
    %187 = vector.shape_cast %186 : vector<1x8x16xbf16> to vector<8x16xbf16>
    %cst_65 = arith.constant dense<0.000000e+00> : vector<8x128xf32>
    %188 = tpu.matmul %187, %8, %cst_65 {dimension_numbers = #tpu.dot_dimension_numbers<[1], [0], [0], [1], [0, 0, 1, 1], [], []>} : vector<8x16xbf16>, vector<16x128xbf16>, vector<8x128xf32> -> vector<8x128xf32>
    %189 = arith.addf %185, %188 : vector<8x128xf32>
    %190 = vector.extract_strided_slice %6 {offsets = [7, 1, 0], sizes = [1, 8, 16], strides = [1, 1, 1]} : vector<9x9x16xbf16> to vector<1x8x16xbf16>
    %191 = vector.shape_cast %190 : vector<1x8x16xbf16> to vector<8x16xbf16>
    %cst_66 = arith.constant dense<0.000000e+00> : vector<8x128xf32>
    %192 = tpu.matmul %191, %10, %cst_66 {dimension_numbers = #tpu.dot_dimension_numbers<[1], [0], [0], [1], [0, 0, 1, 1], [], []>} : vector<8x16xbf16>, vector<16x128xbf16>, vector<8x128xf32> -> vector<8x128xf32>
    %193 = arith.addf %189, %192 : vector<8x128xf32>
    %194 = vector.extract_strided_slice %6 {offsets = [8, 0, 0], sizes = [1, 8, 16], strides = [1, 1, 1]} : vector<9x9x16xbf16> to vector<1x8x16xbf16>
    %195 = vector.shape_cast %194 : vector<1x8x16xbf16> to vector<8x16xbf16>
    %cst_67 = arith.constant dense<0.000000e+00> : vector<8x128xf32>
    %196 = tpu.matmul %195, %12, %cst_67 {dimension_numbers = #tpu.dot_dimension_numbers<[1], [0], [0], [1], [0, 0, 1, 1], [], []>} : vector<8x16xbf16>, vector<16x128xbf16>, vector<8x128xf32> -> vector<8x128xf32>
    %197 = arith.addf %193, %196 : vector<8x128xf32>
    %198 = vector.extract_strided_slice %6 {offsets = [8, 1, 0], sizes = [1, 8, 16], strides = [1, 1, 1]} : vector<9x9x16xbf16> to vector<1x8x16xbf16>
    %199 = vector.shape_cast %198 : vector<1x8x16xbf16> to vector<8x16xbf16>
    %cst_68 = arith.constant dense<0.000000e+00> : vector<8x128xf32>
    %200 = tpu.matmul %199, %14, %cst_68 {dimension_numbers = #tpu.dot_dimension_numbers<[1], [0], [0], [1], [0, 0, 1, 1], [], []>} : vector<8x16xbf16>, vector<16x128xbf16>, vector<8x128xf32> -> vector<8x128xf32>
    %201 = arith.addf %197, %200 : vector<8x128xf32>
    %cst_69 = arith.constant dense<0.000000e+00> : vector<128xf32>
    %202 = vector.multi_reduction <add>, %201, %cst_69 [0] : vector<8x128xf32> to vector<128xf32>
    %203 = vector.shape_cast %202 : vector<128xf32> to vector<1x128xf32>
    %204 = arith.addf %180, %203 : vector<1x128xf32>
    %205 = arith.mulf %201, %201 : vector<8x128xf32>
    %cst_70 = arith.constant dense<0.000000e+00> : vector<128xf32>
    %206 = vector.multi_reduction <add>, %205, %cst_70 [0] : vector<8x128xf32> to vector<128xf32>
    %207 = vector.shape_cast %206 : vector<128xf32> to vector<1x128xf32>
    %208 = arith.addf %184, %207 : vector<1x128xf32>
    %209 = tpu.concatenate %33, %57, %81, %105, %129, %153, %177, %201 in 0 : vector<8x128xf32>, vector<8x128xf32>, vector<8x128xf32>, vector<8x128xf32>, vector<8x128xf32>, vector<8x128xf32>, vector<8x128xf32>, vector<8x128xf32> -> vector<64x128xf32>
    %c0_71 = arith.constant 0 : index
    %c0_72 = arith.constant 0 : index
    %c0_73 = arith.constant 0 : index
    %210 = vector.load %arg3[%c0_71, %c0_72, %c0_73] : memref<1x64x128xf32, #tpu.memory_space<vmem>>, vector<1x64x128xf32>
    %211 = vector.shape_cast %210 : vector<1x64x128xf32> to vector<64x128xf32>
    %212 = vector.shape_cast %209 : vector<64x128xf32> to vector<1x64x128xf32>
    tpu.vector_store %arg3[%c0_71, %c0_72, %c0_73], %212 {strides = array<i32>} : memref<1x64x128xf32, #tpu.memory_space<vmem>>, vector<1x64x128xf32>,
    %c0_74 = arith.constant 0 : index
    %c0_75 = arith.constant 0 : index
    %c0_76 = arith.constant 0 : index
    %213 = vector.load %arg4[%c0_74, %c0_75, %c0_76] : memref<1x2x128xf32, #tpu.memory_space<vmem>>, vector<1x1x128xf32>
    %214 = vector.shape_cast %213 : vector<1x1x128xf32> to vector<1x128xf32>
    %215 = vector.shape_cast %204 : vector<1x128xf32> to vector<1x1x128xf32>
    tpu.vector_store %arg4[%c0_74, %c0_75, %c0_76], %215 {strides = array<i32>} : memref<1x2x128xf32, #tpu.memory_space<vmem>>, vector<1x1x128xf32>,
    %c0_77 = arith.constant 0 : index
    %c1_78 = arith.constant 1 : index
    %c0_79 = arith.constant 0 : index
    %216 = vector.load %arg4[%c0_77, %c1_78, %c0_79] : memref<1x2x128xf32, #tpu.memory_space<vmem>>, vector<1x1x128xf32>
    %217 = vector.shape_cast %216 : vector<1x1x128xf32> to vector<1x128xf32>
    %218 = vector.shape_cast %208 : vector<1x128xf32> to vector<1x1x128xf32>
    tpu.vector_store %arg4[%c0_77, %c1_78, %c0_79], %218 {strides = array<i32>} : memref<1x2x128xf32, #tpu.memory_space<vmem>>, vector<1x1x128xf32>,
    return
  }
  func.func @transform_0(%arg0: i32) -> (i32, i32, i32, i32) {
    %c0_i32 = arith.constant 0 : i32
    %c0_i32_0 = arith.constant 0 : i32
    %c0_i32_1 = arith.constant 0 : i32
    %c0_i32_2 = arith.constant 0 : i32
    return %arg0, %c0_i32, %c0_i32_0, %c0_i32_1 : i32, i32, i32, i32
  }
  func.func @transform_1(%arg0: i32) -> (i32, i32, i32) {
    %c0_i32 = arith.constant 0 : i32
    %c0_i32_0 = arith.constant 0 : i32
    %c0_i32_1 = arith.constant 0 : i32
    %c0_i32_2 = arith.constant 0 : i32
    return %c0_i32, %c0_i32_0, %c0_i32_1 : i32, i32, i32
  }
  func.func @transform_2(%arg0: i32) -> (i32, i32, i32) {
    %c0_i32 = arith.constant 0 : i32
    %c0_i32_0 = arith.constant 0 : i32
    %c0_i32_1 = arith.constant 0 : i32
    return %arg0, %c0_i32, %c0_i32_0 : i32, i32, i32
  }
  func.func @transform_3(%arg0: i32) -> (i32, i32, i32) {
    %c0_i32 = arith.constant 0 : i32
    %c0_i32_0 = arith.constant 0 : i32
    %c0_i32_1 = arith.constant 0 : i32
    return %arg0, %c0_i32, %c0_i32_0 : i32, i32, i32
  }
}

module attributes {stable_mosaic.version = 11 : i64} {
  func.func @_bn_apply_kernel(%arg0: i32, %arg1: memref<1x64x128xf32, #tpu.memory_space<vmem>>, %arg2: memref<1x128xf32, #tpu.memory_space<vmem>>, %arg3: memref<1x128xf32, #tpu.memory_space<vmem>>, %arg4: memref<1x64x128xf32, #tpu.memory_space<vmem>>) attributes {dimension_semantics = [#tpu.dimension_semantics<parallel>], iteration_bounds = array<i64: 2>, scalar_prefetch = 0 : i64, scratch_operands = 0 : i64, tpu.core_type = #tpu.core_type<tc>, window_params = [{transform_indices = @transform_0, window_bounds = array<i64: 1, 64, 128>}, {pipeline_mode = #tpu.pipeline_mode<synchronous>, transform_indices = @transform_1, window_bounds = array<i64: 1, 128>}, {pipeline_mode = #tpu.pipeline_mode<synchronous>, transform_indices = @transform_2, window_bounds = array<i64: 1, 128>}, {transform_indices = @transform_3, window_bounds = array<i64: 1, 64, 128>}]} {
    %c0 = arith.constant 0 : index
    %c0_0 = arith.constant 0 : index
    %c0_1 = arith.constant 0 : index
    %0 = vector.load %arg1[%c0, %c0_0, %c0_1] : memref<1x64x128xf32, #tpu.memory_space<vmem>>, vector<1x64x128xf32>
    %c0_2 = arith.constant 0 : index
    %c0_3 = arith.constant 0 : index
    %1 = vector.load %arg2[%c0_2, %c0_3] : memref<1x128xf32, #tpu.memory_space<vmem>>, vector<1x128xf32>
    %2 = vector.shape_cast %1 : vector<1x128xf32> to vector<1x1x128xf32>
    %3 = vector.broadcast %2 : vector<1x1x128xf32> to vector<1x64x128xf32>
    %4 = arith.mulf %0, %3 : vector<1x64x128xf32>
    %c0_4 = arith.constant 0 : index
    %c0_5 = arith.constant 0 : index
    %5 = vector.load %arg3[%c0_4, %c0_5] : memref<1x128xf32, #tpu.memory_space<vmem>>, vector<1x128xf32>
    %6 = vector.shape_cast %5 : vector<1x128xf32> to vector<1x1x128xf32>
    %7 = vector.broadcast %6 : vector<1x1x128xf32> to vector<1x64x128xf32>
    %8 = arith.addf %4, %7 : vector<1x64x128xf32>
    %c0_6 = arith.constant 0 : index
    %c0_7 = arith.constant 0 : index
    %c0_8 = arith.constant 0 : index
    %9 = vector.load %arg4[%c0_6, %c0_7, %c0_8] : memref<1x64x128xf32, #tpu.memory_space<vmem>>, vector<1x64x128xf32>
    tpu.vector_store %arg4[%c0_6, %c0_7, %c0_8], %8 {strides = array<i32>} : memref<1x64x128xf32, #tpu.memory_space<vmem>>, vector<1x64x128xf32>,
    return
  }
  func.func @transform_0(%arg0: i32) -> (i32, i32, i32) {
    %c0_i32 = arith.constant 0 : i32
    %c0_i32_0 = arith.constant 0 : i32
    %c0_i32_1 = arith.constant 0 : i32
    return %arg0, %c0_i32, %c0_i32_0 : i32, i32, i32
  }
  func.func @transform_1(%arg0: i32) -> (i32, i32) {
    %c0_i32 = arith.constant 0 : i32
    %c0_i32_0 = arith.constant 0 : i32
    %c0_i32_1 = arith.constant 0 : i32
    return %c0_i32, %c0_i32_0 : i32, i32
  }
  func.func @transform_2(%arg0: i32) -> (i32, i32) {
    %c0_i32 = arith.constant 0 : i32
    %c0_i32_0 = arith.constant 0 : i32
    %c0_i32_1 = arith.constant 0 : i32
    return %c0_i32, %c0_i32_0 : i32, i32
  }
  func.func @transform_3(%arg0: i32) -> (i32, i32, i32) {
    %c0_i32 = arith.constant 0 : i32
    %c0_i32_0 = arith.constant 0 : i32
    %c0_i32_1 = arith.constant 0 : i32
    return %arg0, %c0_i32, %c0_i32_0 : i32, i32, i32
  }
}

</mosaic_0001>

<llo_original>
// kernel: downblock_forward.3
$region0: #{downblock_forward.3}
  #allocation0 [shape = 'u32[]', space=smem, size = 0x4, offset = 0x4, fixed_abs, tag = 'smem constant byte address 0x4 - core index']
  #allocation1 [shape = 'u32[72,128]{1,0:T(1,128)}', space=vmem, size = 0x9000, scoped, tag = 'internal scratch']
  %s0 = inlined_call_operand.vmem [shape: f32[2,64,128], index: 0, kind: input, shape index: {}]
  %s1 = inlined_call_operand.vmem [shape: f32[1,128], index: 1, kind: input, shape index: {}]
  %s2 = inlined_call_operand.vmem [shape: f32[1,128], index: 2, kind: input, shape index: {}]
  %s3 = inlined_call_operand.vmem [shape: f32[2,64,128], index: 3, kind: output, shape index: {}]
  %s4 = sld [smem:[#allocation0]]
  $region45: #{downblock_forward.3} parent=0
    _
  %s6 = ssub.s32 1, %s4
  %s7 = scalar_select 0, %s6, %s4
  loop: start=0, step=1, limit=4
  $region2: #{downblock_forward.3} parent=0 // loop_pre_header
    _
  $region3: #{downblock_forward.3} parent=0 // loop_header
    %s9 = sphi 0, %s13
    %p10 = scmp.ge.s32.totalorder %s9, 4
    %s19 = sphi 0, %s21
    %s22 = sphi 0, %s19
    %s23 = sphi 0, %s22
    %s39 = sphi 0, %s23
    %s43 = sphi 0, %s43
    %s45 = sphi 0, %s43
    %s46 = sphi 0, %s45
    %s60 = sphi 0, %s46
    %s64 = sphi 0, %s64
    %s66 = sphi 0, %s64
    %s67 = sphi 0, %s66
    %s81 = sphi 0, %s67
    %s87 = sphi 0, %s89
    %s90 = sphi 0, %s87
    %s91 = sphi 0, %s90
    %s107 = sphi 0, %s91
  $region4: #{downblock_forward.3} parent=0 // loop_header_branch
    %12 = sbr.rel (%p10) target = $region8
  $region5: #{downblock_forward.3} parent=0 // loop_body
    %s14 = ssub.s32 %s9, 1
    %s15 = ssub.s32 %s9, 2
    %s16 = sadd.s32 %s9, 1
    %s17 = ssub.s32 %s9, %s16
    %p18 = scmp.eq.s32.totalorder %s17, 0
    %s20 = sadd.s32 %s19, 1
    %s21 = scalar_select %p18, %s19, %s20
    %p24 = pneg %p18
    %p25 = scmp.eq.s32.totalorder %s9, 1
    %p26 = por %p24, %p25
    %p27 = scmp.ne.s32.totalorder %s19, %s22
    %p28 = scmp.eq.s32.totalorder %s9, 0
    %p29 = por %p27, %p28
    %p30 = scmp.ne.s32.totalorder %s19, %s22
    %p31 = scmp.eq.s32.totalorder %s14, 1
    %p32 = por %p30, %p31
    %p33 = scmp.ne.s32.totalorder %s22, %s23
    %p34 = scmp.eq.s32.totalorder %s14, 0
    %p35 = por %p33, %p34
    %p36 = scmp.ne.s32.totalorder %s22, %s23
    %p37 = scmp.eq.s32.totalorder %s15, 1
    %p38 = por %p36, %p37
    %p40 = scmp.ne.s32.totalorder %s23, %s39
    %p41 = scmp.eq.s32.totalorder %s15, 0
    %p42 = por %p40, %p41
    %s44 = sadd.s32 %s43, 1
    %p47 = scmp.eq.s32.totalorder %s9, 1
    %p48 = scmp.ne.s32.totalorder %s43, %s45
    %p49 = scmp.eq.s32.totalorder %s9, 0
    %p50 = por %p48, %p49
    %p51 = scmp.ne.s32.totalorder %s43, %s45
    %p52 = scmp.eq.s32.totalorder %s14, 1
    %p53 = por %p51, %p52
    %p54 = scmp.ne.s32.totalorder %s45, %s46
    %p55 = scmp.eq.s32.totalorder %s14, 0
    %p56 = por %p54, %p55
    %p57 = scmp.ne.s32.totalorder %s45, %s46
    %p58 = scmp.eq.s32.totalorder %s15, 1
    %p59 = por %p57, %p58
    %p61 = scmp.ne.s32.totalorder %s46, %s60
    %p62 = scmp.eq.s32.totalorder %s15, 0
    %p63 = por %p61, %p62
    %s65 = sadd.s32 %s64, 1
    %p68 = scmp.eq.s32.totalorder %s9, 1
    %p69 = scmp.ne.s32.totalorder %s64, %s66
    %p70 = scmp.eq.s32.totalorder %s9, 0
    %p71 = por %p69, %p70
    %p72 = scmp.ne.s32.totalorder %s64, %s66
    %p73 = scmp.eq.s32.totalorder %s14, 1
    %p74 = por %p72, %p73
    %p75 = scmp.ne.s32.totalorder %s66, %s67
    %p76 = scmp.eq.s32.totalorder %s14, 0
    %p77 = por %p75, %p76
    %p78 = scmp.ne.s32.totalorder %s66, %s67
    %p79 = scmp.eq.s32.totalorder %s15, 1
    %p80 = por %p78, %p79
    %p82 = scmp.ne.s32.totalorder %s67, %s81
    %p83 = scmp.eq.s32.totalorder %s15, 0
    %p84 = por %p82, %p83
    %s85 = ssub.s32 %s9, %s16
    %p86 = scmp.eq.s32.totalorder %s85, 0
    %s88 = sadd.s32 %s87, 1
    %s89 = scalar_select %p86, %s87, %s88
    %p92 = pneg %p86
    %p93 = scmp.eq.s32.totalorder %s9, 1
    %p94 = por %p92, %p93
    %p95 = scmp.ne.s32.totalorder %s87, %s90
    %p96 = scmp.eq.s32.totalorder %s9, 0
    %p97 = por %p95, %p96
    %p98 = scmp.ne.s32.totalorder %s87, %s90
    %p99 = scmp.eq.s32.totalorder %s14, 1
    %p100 = por %p98, %p99
    %p101 = scmp.ne.s32.totalorder %s90, %s91
    %p102 = scmp.eq.s32.totalorder %s14, 0
    %p103 = por %p101, %p102
    %p104 = scmp.ne.s32.totalorder %s90, %s91
    %p105 = scmp.eq.s32.totalorder %s15, 1
    %p106 = por %p104, %p105
    %p108 = scmp.ne.s32.totalorder %s91, %s107
    %p109 = scmp.eq.s32.totalorder %s15, 0
    %p110 = por %p108, %p109
    %p111 = scmp.le.s32.totalorder 1, %s9
    %p112 = scmp.lt.s32.totalorder %s9, 3
    %p113 = pnand %p111, %p112
    %p114 = pneg %p113
    // Predicated region
    $region9: #{downblock_forward.3} parent=5 // pred_check
      _
    $region10: #{downblock_forward.3} parent=5 // pred_check_branch
      %116 = sbr.rel (%p113) target = $region12
    $region11: #{downblock_forward.3} parent=5 // pred_region
      %s117 = ssub.s32 %s9, 1
      // Predicated region
      $region13: #{downblock_forward.3} parent=11 // pred_check
        %p118 = pneg %p56
      $region14: #{downblock_forward.3} parent=11 // pred_check_branch
        %120 = sbr.rel (%p118) target = $region16
      $region15: #{downblock_forward.3} parent=11 // pred_region
        _
      $region16: #{downblock_forward.3} parent=11 // pred_fallthru
        _
      // Predicated region
      $region17: #{downblock_forward.3} parent=11 // pred_check
        %p121 = pneg %p77
      $region18: #{downblock_forward.3} parent=11 // pred_check_branch
        %123 = sbr.rel (%p121) target = $region20
      $region19: #{downblock_forward.3} parent=11 // pred_region
        _
      $region20: #{downblock_forward.3} parent=11 // pred_fallthru
        _
    $region12: #{downblock_forward.3} parent=5 // pred_fallthru
      _
    %p124 = scmp.lt.s32.totalorder %s9, 2
    // Predicated region
    $region21: #{downblock_forward.3} parent=5 // pred_check
      %p125 = pneg %p124
    $region22: #{downblock_forward.3} parent=5 // pred_check_branch
      %127 = sbr.rel (%p125) target = $region24
    $region23: #{downblock_forward.3} parent=5 // pred_region
      // Predicated region
      $region25: #{downblock_forward.3} parent=23 // pred_check
        %p128 = pneg %p29
      $region26: #{downblock_forward.3} parent=23 // pred_check_branch
        %130 = sbr.rel (%p128) target = $region28
      $region27: #{downblock_forward.3} parent=23 // pred_region
        %p131 = scmp.lt.s32.totalorder %s9, 1
        %s132 = scalar_select %p131, %s9, 1
        %s133 = smul.addr %s132, 8
        %s134 = smul.addr %s133, 8
        %s135 = scalar_lea.vmem %s0, %s134
      $region28: #{downblock_forward.3} parent=23 // pred_fallthru
        _
    $region24: #{downblock_forward.3} parent=5 // pred_fallthru
      _
    %p136 = scmp.le.s32.totalorder 1, %s9
    %p137 = scmp.lt.s32.totalorder %s9, 3
    %p138 = pnand %p136, %p137
    %p139 = pneg %p138
    // Predicated region
    $region29: #{downblock_forward.3} parent=5 // pred_check
      _
    $region30: #{downblock_forward.3} parent=5 // pred_check_branch
      %141 = sbr.rel (%p138) target = $region32
    $region31: #{downblock_forward.3} parent=5 // pred_region
      %s142 = ssub.s32 %s9, 1
      %p143 = scmp.lt.s32.totalorder %s14, 1
      %s144 = scalar_select %p143, %s14, 1
      %s145 = smul.addr %s144, 8
      %s146 = smul.addr %s145, 8
      %s147 = scalar_lea.vmem %s0, %s146
      %p148 = pneg %p35
      %p149 = pneg %p32
      %p150 = pneg %p56
      %p151 = pneg %p53
      %p152 = pneg %p77
      %p153 = pneg %p74
      %p154 = pneg %p103
      %p155 = pneg %p100
      %p156 = scmp.lt.s32.totalorder %s14, 1
      %s157 = scalar_select %p156, %s14, 1
      %s158 = smul.addr %s157, 8
      %s159 = smul.addr %s158, 8
      %s160 = scalar_lea.vmem %s3, %s159
      %p161 = scmp.lt.s32.totalorder %s14, 1
      %s162 = scalar_select %p161, %s14, 1
      %s163 = smul.addr %s162, 8
      %s164 = smul.addr %s163, 8
      %s165 = scalar_lea.vmem %s0, %s164
      %p166 = scmp.lt.s32.totalorder %s14, 1
      %s167 = scalar_select %p166, %s14, 1
      %s168 = smul.addr %s167, 8
      %s169 = smul.addr %s168, 8
      %s170 = scalar_lea.vmem %s3, %s169
      %v171 = vld [vmem:[%s165] sm:$0xff]
      %v172 = vld [vmem:[%s165 + $0x8] sm:$0xff]
      %v173 = vld [vmem:[%s165 + $0x10] sm:$0xff]
      %v174 = vld [vmem:[%s165 + $0x18] sm:$0xff]
      %v175 = vld [vmem:[%s165 + $0x20] sm:$0xff]
      %v176 = vld [vmem:[%s165 + $0x28] sm:$0xff]
      %v177 = vld [vmem:[%s165 + $0x30] sm:$0xff]
      %v178 = vld [vmem:[%s165 + $0x38] sm:$0xff]
      %v179 = vld [vmem:[%s1] sm:$0x1]
      %v181 = vperm.slane %v179, 0
      %v183 = vmul.f32 %v171, %v181
      %v184 = vmul.f32 %v172, %v181
      %v185 = vmul.f32 %v173, %v181
      %v186 = vmul.f32 %v174, %v181
      %v187 = vmul.f32 %v175, %v181
      %v188 = vmul.f32 %v176, %v181
      %v189 = vmul.f32 %v177, %v181
      %v190 = vmul.f32 %v178, %v181
      %v191 = vld [vmem:[%s2] sm:$0x1]
      %v193 = vperm.slane %v191, 0
      %v195 = vadd.f32 %v183, %v193
      %v196 = vadd.f32 %v184, %v193
      %v197 = vadd.f32 %v185, %v193
      %v198 = vadd.f32 %v186, %v193
      %v199 = vadd.f32 %v187, %v193
      %v200 = vadd.f32 %v188, %v193
      %v201 = vadd.f32 %v189, %v193
      %v202 = vadd.f32 %v190, %v193
      %203 = vst [vmem:[%s170] sm:$0xff] %v195
      %204 = vst [vmem:[%s170 + $0x8] sm:$0xff] %v196
      %205 = vst [vmem:[%s170 + $0x10] sm:$0xff] %v197
      %206 = vst [vmem:[%s170 + $0x18] sm:$0xff] %v198
      %207 = vst [vmem:[%s170 + $0x20] sm:$0xff] %v199
      %208 = vst [vmem:[%s170 + $0x28] sm:$0xff] %v200
      %209 = vst [vmem:[%s170 + $0x30] sm:$0xff] %v201
      %210 = vst [vmem:[%s170 + $0x38] sm:$0xff] %v202
      %p211 = scmp.lt.s32.totalorder %s14, 1
      %s212 = scalar_select %p211, %s14, 1
      %s213 = smul.addr %s212, 8
      %s214 = smul.addr %s213, 8
      %s215 = scalar_lea.vmem %s3, %s214
      // Predicated region
      $region33: #{downblock_forward.3} parent=31 // pred_check
        %p216 = pneg %p100
      $region34: #{downblock_forward.3} parent=31 // pred_check_branch
        %218 = sbr.rel (%p216) target = $region36
      $region35: #{downblock_forward.3} parent=31 // pred_region
        _
      $region36: #{downblock_forward.3} parent=31 // pred_fallthru
        _
    $region32: #{downblock_forward.3} parent=5 // pred_fallthru
      _
    %p219 = scmp.le.s32.totalorder 2, %s9
    // Predicated region
    $region37: #{downblock_forward.3} parent=5 // pred_check
      %p220 = pneg %p219
    $region38: #{downblock_forward.3} parent=5 // pred_check_branch
      %222 = sbr.rel (%p220) target = $region40
    $region39: #{downblock_forward.3} parent=5 // pred_region
      %s223 = ssub.s32 %s9, 2
      // Predicated region
      $region41: #{downblock_forward.3} parent=39 // pred_check
        %p224 = pneg %p106
      $region42: #{downblock_forward.3} parent=39 // pred_check_branch
        %226 = sbr.rel (%p224) target = $region44
      $region43: #{downblock_forward.3} parent=39 // pred_region
        %p227 = scmp.lt.s32.totalorder %s15, 1
        %s228 = scalar_select %p227, %s15, 1
        %s229 = smul.addr %s228, 8
        %s230 = smul.addr %s229, 8
        %s231 = scalar_lea.vmem %s3, %s230
      $region44: #{downblock_forward.3} parent=39 // pred_fallthru
        _
    $region40: #{downblock_forward.3} parent=5 // pred_fallthru
      _
  $region6: #{downblock_forward.3} parent=0 // loop_footer
    %s13 = sadd.s32 1, %s9
  $region7: #{downblock_forward.3} parent=0 // loop_footer_branch
    %8 = sbr.rel target = $region3
  $region8: #{downblock_forward.3} parent=0 // loop_exit
    _

// kernel: downblock_forward.2
$region0: #{downblock_forward.2}
  #allocation0 [shape = 'u32[]', space=smem, size = 0x4, offset = 0x4, fixed_abs, tag = 'smem constant byte address 0x4 - core index']
  #allocation1 [shape = 'u32[72,128]{1,0:T(1,128)}', space=vmem, size = 0x9000, scoped, tag = 'internal scratch']
  %s0 = inlined_call_operand.vmem [shape: bf16[2,9,9,16], index: 0, kind: input, shape index: {}]
  %s1 = inlined_call_operand.vmem [shape: bf16[4,16,128], index: 1, kind: input, shape index: {}]
  %s2 = inlined_call_operand.vmem [shape: f32[2,64,128], index: 2, kind: output, shape index: {0}]
  %s3 = inlined_call_operand.vmem [shape: f32[2,2,128], index: 3, kind: output, shape index: {1}]
  %4 = xla_tuple %s2, %s3
  %s5 = sld [smem:[#allocation0]]
  $region49: #{downblock_forward.2} parent=0
    _
  %s7 = ssub.s32 1, %s5
  %s8 = scalar_select 0, %s7, %s5
  loop: start=0, step=1, limit=4
  $region2: #{downblock_forward.2} parent=0 // loop_pre_header
    _
  $region3: #{downblock_forward.2} parent=0 // loop_header
    %s10 = sphi 0, %s14
    %p11 = scmp.ge.s32.totalorder %s10, 4
    %s20 = sphi 0, %s22
    %s23 = sphi 0, %s20
    %s24 = sphi 0, %s23
    %s40 = sphi 0, %s24
    %s44 = sphi 0, %s44
    %s46 = sphi 0, %s44
    %s47 = sphi 0, %s46
    %s61 = sphi 0, %s47
    %s67 = sphi 0, %s69
    %s70 = sphi 0, %s67
    %s71 = sphi 0, %s70
    %s87 = sphi 0, %s71
    %s93 = sphi 0, %s95
    %s96 = sphi 0, %s93
    %s97 = sphi 0, %s96
    %s113 = sphi 0, %s97
  $region4: #{downblock_forward.2} parent=0 // loop_header_branch
    %13 = sbr.rel (%p11) target = $region8
  $region5: #{downblock_forward.2} parent=0 // loop_body
    %s15 = ssub.s32 %s10, 1
    %s16 = ssub.s32 %s10, 2
    %s17 = sadd.s32 %s10, 1
    %s18 = ssub.s32 %s10, %s17
    %p19 = scmp.eq.s32.totalorder %s18, 0
    %s21 = sadd.s32 %s20, 1
    %s22 = scalar_select %p19, %s20, %s21
    %p25 = pneg %p19
    %p26 = scmp.eq.s32.totalorder %s10, 1
    %p27 = por %p25, %p26
    %p28 = scmp.ne.s32.totalorder %s20, %s23
    %p29 = scmp.eq.s32.totalorder %s10, 0
    %p30 = por %p28, %p29
    %p31 = scmp.ne.s32.totalorder %s20, %s23
    %p32 = scmp.eq.s32.totalorder %s15, 1
    %p33 = por %p31, %p32
    %p34 = scmp.ne.s32.totalorder %s23, %s24
    %p35 = scmp.eq.s32.totalorder %s15, 0
    %p36 = por %p34, %p35
    %p37 = scmp.ne.s32.totalorder %s23, %s24
    %p38 = scmp.eq.s32.totalorder %s16, 1
    %p39 = por %p37, %p38
    %p41 = scmp.ne.s32.totalorder %s24, %s40
    %p42 = scmp.eq.s32.totalorder %s16, 0
    %p43 = por %p41, %p42
    %s45 = sadd.s32 %s44, 1
    %p48 = scmp.eq.s32.totalorder %s10, 1
    %p49 = scmp.ne.s32.totalorder %s44, %s46
    %p50 = scmp.eq.s32.totalorder %s10, 0
    %p51 = por %p49, %p50
    %p52 = scmp.ne.s32.totalorder %s44, %s46
    %p53 = scmp.eq.s32.totalorder %s15, 1
    %p54 = por %p52, %p53
    %p55 = scmp.ne.s32.totalorder %s46, %s47
    %p56 = scmp.eq.s32.totalorder %s15, 0
    %p57 = por %p55, %p56
    %p58 = scmp.ne.s32.totalorder %s46, %s47
    %p59 = scmp.eq.s32.totalorder %s16, 1
    %p60 = por %p58, %p59
    %p62 = scmp.ne.s32.totalorder %s47, %s61
    %p63 = scmp.eq.s32.totalorder %s16, 0
    %p64 = por %p62, %p63
    %s65 = ssub.s32 %s10, %s17
    %p66 = scmp.eq.s32.totalorder %s65, 0
    %s68 = sadd.s32 %s67, 1
    %s69 = scalar_select %p66, %s67, %s68
    %p72 = pneg %p66
    %p73 = scmp.eq.s32.totalorder %s10, 1
    %p74 = por %p72, %p73
    %p75 = scmp.ne.s32.totalorder %s67, %s70
    %p76 = scmp.eq.s32.totalorder %s10, 0
    %p77 = por %p75, %p76
    %p78 = scmp.ne.s32.totalorder %s67, %s70
    %p79 = scmp.eq.s32.totalorder %s15, 1
    %p80 = por %p78, %p79
    %p81 = scmp.ne.s32.totalorder %s70, %s71
    %p82 = scmp.eq.s32.totalorder %s15, 0
    %p83 = por %p81, %p82
    %p84 = scmp.ne.s32.totalorder %s70, %s71
    %p85 = scmp.eq.s32.totalorder %s16, 1
    %p86 = por %p84, %p85
    %p88 = scmp.ne.s32.totalorder %s71, %s87
    %p89 = scmp.eq.s32.totalorder %s16, 0
    %p90 = por %p88, %p89
    %s91 = ssub.s32 %s10, %s17
    %p92 = scmp.eq.s32.totalorder %s91, 0
    %s94 = sadd.s32 %s93, 1
    %s95 = scalar_select %p92, %s93, %s94
    %p98 = pneg %p92
    %p99 = scmp.eq.s32.totalorder %s10, 1
    %p100 = por %p98, %p99
    %p101 = scmp.ne.s32.totalorder %s93, %s96
    %p102 = scmp.eq.s32.totalorder %s10, 0
    %p103 = por %p101, %p102
    %p104 = scmp.ne.s32.totalorder %s93, %s96
    %p105 = scmp.eq.s32.totalorder %s15, 1
    %p106 = por %p104, %p105
    %p107 = scmp.ne.s32.totalorder %s96, %s97
    %p108 = scmp.eq.s32.totalorder %s15, 0
    %p109 = por %p107, %p108
    %p110 = scmp.ne.s32.totalorder %s96, %s97
    %p111 = scmp.eq.s32.totalorder %s16, 1
    %p112 = por %p110, %p111
    %p114 = scmp.ne.s32.totalorder %s97, %s113
    %p115 = scmp.eq.s32.totalorder %s16, 0
    %p116 = por %p114, %p115
    %p117 = scmp.le.s32.totalorder 1, %s10
    %p118 = scmp.lt.s32.totalorder %s10, 3
    %p119 = pnand %p117, %p118
    %p120 = pneg %p119
    // Predicated region
    $region9: #{downblock_forward.2} parent=5 // pred_check
      _
    $region10: #{downblock_forward.2} parent=5 // pred_check_branch
      %122 = sbr.rel (%p119) target = $region12
    $region11: #{downblock_forward.2} parent=5 // pred_region
      %s123 = ssub.s32 %s10, 1
      // Predicated region
      $region13: #{downblock_forward.2} parent=11 // pred_check
        %p124 = pneg %p57
      $region14: #{downblock_forward.2} parent=11 // pred_check_branch
        %126 = sbr.rel (%p124) target = $region16
      $region15: #{downblock_forward.2} parent=11 // pred_region
        _
      $region16: #{downblock_forward.2} parent=11 // pred_fallthru
        _
    $region12: #{downblock_forward.2} parent=5 // pred_fallthru
      _
    %p127 = scmp.lt.s32.totalorder %s10, 2
    // Predicated region
    $region17: #{downblock_forward.2} parent=5 // pred_check
      %p128 = pneg %p127
    $region18: #{downblock_forward.2} parent=5 // pred_check_branch
      %130 = sbr.rel (%p128) target = $region20
    $region19: #{downblock_forward.2} parent=5 // pred_region
      // Predicated region
      $region21: #{downblock_forward.2} parent=19 // pred_check
        %p131 = pneg %p30
      $region22: #{downblock_forward.2} parent=19 // pred_check_branch
        %133 = sbr.rel (%p131) target = $region24
      $region23: #{downblock_forward.2} parent=19 // pred_region
        %p134 = scmp.lt.s32.totalorder %s10, 1
        %s135 = scalar_select %p134, %s10, 1
        %s136 = smul.addr %s135, 18
        %s137 = smul.addr %s136, 4
        %s138 = scalar_lea.vmem %s0, %s137
      $region24: #{downblock_forward.2} parent=19 // pred_fallthru
        _
    $region20: #{downblock_forward.2} parent=5 // pred_fallthru
      _
    %p139 = scmp.le.s32.totalorder 1, %s10
    %p140 = scmp.lt.s32.totalorder %s10, 3
    %p141 = pnand %p139, %p140
    %p142 = pneg %p141
    // Predicated region
    $region25: #{downblock_forward.2} parent=5 // pred_check
      _
    $region26: #{downblock_forward.2} parent=5 // pred_check_branch
      %144 = sbr.rel (%p141) target = $region28
    $region27: #{downblock_forward.2} parent=5 // pred_region
      %s145 = ssub.s32 %s10, 1
      %p146 = scmp.lt.s32.totalorder %s15, 1
      %s147 = scalar_select %p146, %s15, 1
      %s148 = smul.addr %s147, 18
      %s149 = smul.addr %s148, 4
      %s150 = scalar_lea.vmem %s0, %s149
      %p151 = pneg %p36
      %p152 = pneg %p33
      %p153 = pneg %p57
      %p154 = pneg %p54
      %p155 = pneg %p83
      %p156 = pneg %p80
      %p157 = scmp.lt.s32.totalorder %s15, 1
      %s158 = scalar_select %p157, %s15, 1
      %s159 = smul.addr %s158, 8
      %s160 = smul.addr %s159, 8
      %s161 = scalar_lea.vmem %s2, %s160
      %p162 = pneg %p109
      %p163 = pneg %p106
      %p164 = scmp.lt.s32.totalorder %s15, 1
      %s165 = scalar_select %p164, %s15, 1
      %s166 = smul.addr %s165, 2
      %s167 = scalar_lea.vmem %s3, %s166
      %p168 = scmp.lt.s32.totalorder %s15, 1
      %s169 = scalar_select %p168, %s15, 1
      %s170 = smul.addr %s169, 18
      %s171 = smul.addr %s170, 4
      %s172 = scalar_lea.vmem %s0, %s171
      %p173 = scmp.lt.s32.totalorder %s15, 1
      %s174 = scalar_select %p173, %s15, 1
      %s175 = smul.addr %s174, 8
      %s176 = smul.addr %s175, 8
      %s177 = scalar_lea.vmem %s2, %s176
      %p178 = scmp.lt.s32.totalorder %s15, 1
      %s179 = scalar_select %p178, %s15, 1
      %s180 = smul.addr %s179, 2
      %s181 = scalar_lea.vmem %s3, %s180
      %v183 = vld [vmem:[%s172] sm:$0xf]
      %v184 = vld [vmem:[%s172 + $0x4] sm:$0x1]
      %v185 = vld [vmem:[%s172 + $0x8] sm:$0xf]
      %v186 = vld [vmem:[%s172 + $0xc] sm:$0x1]
      %v187 = vld [vmem:[%s172 + $0x10] sm:$0xf]
      %v188 = vld [vmem:[%s172 + $0x14] sm:$0x1]
      %v189 = vld [vmem:[%s172 + $0x18] sm:$0xf]
      %v190 = vld [vmem:[%s172 + $0x1c] sm:$0x1]
      %v191 = vld [vmem:[%s172 + $0x20] sm:$0xf]
      %v192 = vld [vmem:[%s172 + $0x24] sm:$0x1]
      %v193 = vld [vmem:[%s172 + $0x28] sm:$0xf]
      %v194 = vld [vmem:[%s172 + $0x2c] sm:$0x1]
      %v195 = vld [vmem:[%s172 + $0x30] sm:$0xf]
      %v196 = vld [vmem:[%s172 + $0x34] sm:$0x1]
      %v197 = vld [vmem:[%s172 + $0x38] sm:$0xf]
      %v198 = vld [vmem:[%s172 + $0x3c] sm:$0x1]
      %v199 = vld [vmem:[%s172 + $0x40] sm:$0xf]
      %v200 = vld [vmem:[%s172 + $0x44] sm:$0x1]
      %v201 = vunpack.c.l.bf16 %v183
      %v202 = vunpack.c.l.bf16 %v184
      %v203 = vunpack.c.l.bf16 %v185
      %v204 = vunpack.c.l.bf16 %v186
      %v205 = vunpack.c.l.bf16 %v187
      %v206 = vunpack.c.l.bf16 %v188
      %v207 = vunpack.c.l.bf16 %v189
      %v208 = vunpack.c.l.bf16 %v190
      %v209 = vunpack.c.l.bf16 %v191
      %v210 = vunpack.c.l.bf16 %v192
      %v211 = vunpack.c.l.bf16 %v193
      %v212 = vunpack.c.l.bf16 %v194
      %v213 = vunpack.c.l.bf16 %v195
      %v214 = vunpack.c.l.bf16 %v196
      %v215 = vunpack.c.l.bf16 %v197
      %v216 = vunpack.c.l.bf16 %v198
      %v217 = vunpack.c.l.bf16 %v199
      %v218 = vunpack.c.l.bf16 %v200
      %vm219 = vcmp.gt.f32.partialorder %v201, 0.0
      %vm220 = vcmp.gt.f32.partialorder %v202, 0.0
      %vm221 = vcmp.gt.f32.partialorder %v203, 0.0
      %vm222 = vcmp.gt.f32.partialorder %v204, 0.0
      %vm223 = vcmp.gt.f32.partialorder %v205, 0.0
      %vm224 = vcmp.gt.f32.partialorder %v206, 0.0
      %vm225 = vcmp.gt.f32.partialorder %v207, 0.0
      %vm226 = vcmp.gt.f32.partialorder %v208, 0.0
      %vm227 = vcmp.gt.f32.partialorder %v209, 0.0
      %vm228 = vcmp.gt.f32.partialorder %v210, 0.0
      %vm229 = vcmp.gt.f32.partialorder %v211, 0.0
      %vm230 = vcmp.gt.f32.partialorder %v212, 0.0
      %vm231 = vcmp.gt.f32.partialorder %v213, 0.0
      %vm232 = vcmp.gt.f32.partialorder %v214, 0.0
      %vm233 = vcmp.gt.f32.partialorder %v215, 0.0
      %vm234 = vcmp.gt.f32.partialorder %v216, 0.0
      %vm235 = vcmp.gt.f32.partialorder %v217, 0.0
      %vm236 = vcmp.gt.f32.partialorder %v218, 0.0
      %v237 = vmul.f32 %v201, 0.20019531
      %v238 = vmul.f32 %v202, 0.20019531
      %v239 = vmul.f32 %v203, 0.20019531
      %v240 = vmul.f32 %v204, 0.20019531
      %v241 = vmul.f32 %v205, 0.20019531
      %v242 = vmul.f32 %v206, 0.20019531
      %v243 = vmul.f32 %v207, 0.20019531
      %v244 = vmul.f32 %v208, 0.20019531
      %v245 = vmul.f32 %v209, 0.20019531
      %v246 = vmul.f32 %v210, 0.20019531
      %v247 = vmul.f32 %v211, 0.20019531
      %v248 = vmul.f32 %v212, 0.20019531
      %v249 = vmul.f32 %v213, 0.20019531
      %v250 = vmul.f32 %v214, 0.20019531
      %v251 = vmul.f32 %v215, 0.20019531
      %v252 = vmul.f32 %v216, 0.20019531
      %v253 = vmul.f32 %v217, 0.20019531
      %v254 = vmul.f32 %v218, 0.20019531
      %v255 = vpack.c.bf16 %v237, %v237
      %v256 = vpack.c.bf16 %v238, %v238
      %v257 = vpack.c.bf16 %v239, %v239
      %v258 = vpack.c.bf16 %v240, %v240
      %v259 = vpack.c.bf16 %v241, %v241
      %v260 = vpack.c.bf16 %v242, %v242
      %v261 = vpack.c.bf16 %v243, %v243
      %v262 = vpack.c.bf16 %v244, %v244
      %v263 = vpack.c.bf16 %v245, %v245
      %v264 = vpack.c.bf16 %v246, %v246
      %v265 = vpack.c.bf16 %v247, %v247
      %v266 = vpack.c.bf16 %v248, %v248
      %v267 = vpack.c.bf16 %v249, %v249
      %v268 = vpack.c.bf16 %v250, %v250
      %v269 = vpack.c.bf16 %v251, %v251
      %v270 = vpack.c.bf16 %v252, %v252
      %v271 = vpack.c.bf16 %v253, %v253
      %v272 = vpack.c.bf16 %v254, %v254
      %vm273 = vmpackc.low %vm219, %vm219
      %vm274 = vmpackc.low %vm220, %vm220
      %vm275 = vmpackc.low %vm221, %vm221
      %vm276 = vmpackc.low %vm222, %vm222
      %vm277 = vmpackc.low %vm223, %vm223
      %vm278 = vmpackc.low %vm224, %vm224
      %vm279 = vmpackc.low %vm225, %vm225
      %vm280 = vmpackc.low %vm226, %vm226
      %vm281 = vmpackc.low %vm227, %vm227
      %vm282 = vmpackc.low %vm228, %vm228
      %vm283 = vmpackc.low %vm229, %vm229
      %vm284 = vmpackc.low %vm230, %vm230
      %vm285 = vmpackc.low %vm231, %vm231
      %vm286 = vmpackc.low %vm232, %vm232
      %vm287 = vmpackc.low %vm233, %vm233
      %vm288 = vmpackc.low %vm234, %vm234
      %vm289 = vmpackc.low %vm235, %vm235
      %vm290 = vmpackc.low %vm236, %vm236
      %v291 = vsel %vm273, %v183, %v255
      %v292 = vsel %vm274, %v184, %v256
      %v293 = vsel %vm275, %v185, %v257
      %v294 = vsel %vm276, %v186, %v258
      %v295 = vsel %vm277, %v187, %v259
      %v296 = vsel %vm278, %v188, %v260
      %v297 = vsel %vm279, %v189, %v261
      %v298 = vsel %vm280, %v190, %v262
      %v299 = vsel %vm281, %v191, %v263
      %v300 = vsel %vm282, %v192, %v264
      %v301 = vsel %vm283, %v193, %v265
      %v302 = vsel %vm284, %v194, %v266
      %v303 = vsel %vm285, %v195, %v267
      %v304 = vsel %vm286, %v196, %v268
      %v305 = vsel %vm287, %v197, %v269
      %v306 = vsel %vm288, %v198, %v270
      %v307 = vsel %vm289, %v199, %v271
      %v308 = vsel %vm290, %v200, %v272
      %v309 = vld [vmem:[%s1] sm:$0xf]
      %v310 = vld [vmem:[%s1 + $0x4] sm:$0xf]
      %s311 = scalar_lea.vmem %s1, 8
      %v312 = vld [vmem:[%s311] sm:$0xf]
      %v313 = vld [vmem:[%s311 + $0x4] sm:$0xf]
      %s314 = scalar_lea.vmem %s1, 16
      %v315 = vld [vmem:[%s314] sm:$0xf]
      %v316 = vld [vmem:[%s314 + $0x4] sm:$0xf]
      %s317 = scalar_lea.vmem %s1, 24
      %v318 = vld [vmem:[%s317] sm:$0xf]
      %v319 = vld [vmem:[%s317 + $0x4] sm:$0xf]
      %v322 = vunpack.c.l.b16 %v291
      %v323 = vunpack.c.l.b16 %v292
      %v324 = vpack.c.b16 %v323, %v322
      %v326 = vshrl.u32 %v324, 16
      %v328 = vshll.u32 %v324, 16
      %v330 = vrot.slane %v328, 1
      %v331 = vor.u32 %v326, %v330
      %v334 = vunpack.c.l.b16 %v312
      %v335 = vunpack.c.l.b16 %v313
      %v336 = vpack.c.b16 %v335, %v334
      %vm338 = vcmask 130048
      %v340 = vsel %vm338, %v331, 0
      %342 = vmatpush.bf16.msra.mxu0 0
      %343 = vmatpush.bf16.msra.mxu0 0
      %344 = vmatpush.bf16.msra.mxu0 0
      %345 = vmatpush.bf16.msra.mxu0 0
      %346 = vmatpush.bf16.msra.mxu0 0
      %347 = vmatpush.bf16.msra.mxu0 0
      %348 = vmatpush.bf16.msra.mxu0 0
      %349 = vmatpush.bf16.msra.mxu0 %v336
      %350 = vmatmul.bf16.gmra.mxu0 %v340
      %v351 = vpop.f32.mrf.mxu0
      %v352 = vadd.f32 0.0, %v351
      %v353 = vpop.f32.mrf.mxu0
      %354 = vdwg.mxu0
      %v357 = vunpack.c.l.b16 %v309
      %v358 = vunpack.c.l.b16 %v310
      %v359 = vpack.c.b16 %v358, %v357
      %v362 = vsel %vm338, %v291, 0
      %364 = vmatpush.bf16.msra.mxu0 0
      %365 = vmatpush.bf16.msra.mxu0 0
      %366 = vmatpush.bf16.msra.mxu0 0
      %367 = vmatpush.bf16.msra.mxu0 0
      %368 = vmatpush.bf16.msra.mxu0 0
      %369 = vmatpush.bf16.msra.mxu0 0
      %370 = vmatpush.bf16.msra.mxu0 0
      %371 = vmatpush.bf16.msra.mxu0 %v359
      %372 = vmatmul.bf16.gmra.mxu0 %v362
      %v373 = vpop.f32.mrf.mxu0
      %v374 = vadd.f32 %v352, %v373
      %v375 = vpop.f32.mrf.mxu0
      %376 = vdwg.mxu0
      %v379 = vunpack.c.l.b16 %v315
      %v380 = vunpack.c.l.b16 %v316
      %v381 = vpack.c.b16 %v380, %v379
      %v384 = vsel %vm338, %v293, 0
      %386 = vmatpush.bf16.msra.mxu0 0
      %387 = vmatpush.bf16.msra.mxu0 0
      %388 = vmatpush.bf16.msra.mxu0 0
      %389 = vmatpush.bf16.msra.mxu0 0
      %390 = vmatpush.bf16.msra.mxu0 0
      %391 = vmatpush.bf16.msra.mxu0 0
      %392 = vmatpush.bf16.msra.mxu0 0
      %393 = vmatpush.bf16.msra.mxu0 %v381
      %394 = vmatmul.bf16.gmra.mxu0 %v384
      %v395 = vpop.f32.mrf.mxu0
      %v396 = vadd.f32 0.0, %v395
      %v397 = vpop.f32.mrf.mxu0
      %398 = vdwg.mxu0
      %v399 = vadd.f32 %v374, %v396
      %v402 = vunpack.c.l.b16 %v293
      %v403 = vunpack.c.l.b16 %v294
      %v404 = vpack.c.b16 %v403, %v402
      %v406 = vshrl.u32 %v404, 16
      %v408 = vshll.u32 %v404, 16
      %v410 = vrot.slane %v408, 1
      %v411 = vor.u32 %v406, %v410
      %v414 = vunpack.c.l.b16 %v318
      %v415 = vunpack.c.l.b16 %v319
      %v416 = vpack.c.b16 %v415, %v414
      %v419 = vsel %vm338, %v411, 0
      %421 = vmatpush.bf16.msra.mxu0 0
      %422 = vmatpush.bf16.msra.mxu0 0
      %423 = vmatpush.bf16.msra.mxu0 0
      %424 = vmatpush.bf16.msra.mxu0 0
      %425 = vmatpush.bf16.msra.mxu0 0
      %426 = vmatpush.bf16.msra.mxu0 0
      %427 = vmatpush.bf16.msra.mxu0 0
      %428 = vmatpush.bf16.msra.mxu0 %v416
      %429 = vmatmul.bf16.gmra.mxu0 %v419
      %v430 = vpop.f32.mrf.mxu0
      %v431 = vadd.f32 0.0, %v430
      %v432 = vpop.f32.mrf.mxu0
      %433 = vdwg.mxu0
      %v434 = vadd.f32 %v399, %v431
      %v435 = vrot.slane %v434, 4
      %v436 = vadd.f32 %v434, %v435
      %v437 = vrot.slane %v436, 2
      %v438 = vadd.f32 %v436, %v437
      %v439 = vrot.slane %v438, 1
      %v440 = vadd.f32 %v438, %v439
      %v441 = vadd.f32 %v440, 0.0
      %v442 = vmul.f32 %v434, %v434
      %v443 = vrot.slane %v442, 4
      %v444 = vadd.f32 %v442, %v443
      %v445 = vrot.slane %v444, 2
      %v446 = vadd.f32 %v444, %v445
      %v447 = vrot.slane %v446, 1
      %v448 = vadd.f32 %v446, %v447
      %v449 = vadd.f32 %v448, 0.0
      %450 = vmatpush.bf16.msra.mxu0 0
      %451 = vmatpush.bf16.msra.mxu0 0
      %452 = vmatpush.bf16.msra.mxu0 0
      %453 = vmatpush.bf16.msra.mxu0 0
      %454 = vmatpush.bf16.msra.mxu0 0
      %455 = vmatpush.bf16.msra.mxu0 0
      %456 = vmatpush.bf16.msra.mxu0 0
      %457 = vmatpush.bf16.msra.mxu0 %v336
      %458 = vmatmul.bf16.gmra.mxu0 %v419
      %v459 = vpop.f32.mrf.mxu0
      %v460 = vadd.f32 0.0, %v459
      %v461 = vpop.f32.mrf.mxu0
      %462 = vdwg.mxu0
      %463 = vmatpush.bf16.msra.mxu0 0
      %464 = vmatpush.bf16.msra.mxu0 0
      %465 = vmatpush.bf16.msra.mxu0 0
      %466 = vmatpush.bf16.msra.mxu0 0
      %467 = vmatpush.bf16.msra.mxu0 0
      %468 = vmatpush.bf16.msra.mxu0 0
      %469 = vmatpush.bf16.msra.mxu0 0
      %470 = vmatpush.bf16.msra.mxu0 %v359
      %471 = vmatmul.bf16.gmra.mxu0 %v384
      %v472 = vpop.f32.mrf.mxu0
      %v473 = vadd.f32 %v460, %v472
      %v474 = vpop.f32.mrf.mxu0
      %475 = vdwg.mxu0
      %v477 = vsel %vm338, %v295, 0
      %479 = vmatpush.bf16.msra.mxu0 0
      %480 = vmatpush.bf16.msra.mxu0 0
      %481 = vmatpush.bf16.msra.mxu0 0
      %482 = vmatpush.bf16.msra.mxu0 0
      %483 = vmatpush.bf16.msra.mxu0 0
      %484 = vmatpush.bf16.msra.mxu0 0
      %485 = vmatpush.bf16.msra.mxu0 0
      %486 = vmatpush.bf16.msra.mxu0 %v381
      %487 = vmatmul.bf16.gmra.mxu0 %v477
      %v488 = vpop.f32.mrf.mxu0
      %v489 = vadd.f32 0.0, %v488
      %v490 = vpop.f32.mrf.mxu0
      %491 = vdwg.mxu0
      %v492 = vadd.f32 %v473, %v489
      %v495 = vunpack.c.l.b16 %v295
      %v496 = vunpack.c.l.b16 %v296
      %v497 = vpack.c.b16 %v496, %v495
      %v499 = vshrl.u32 %v497, 16
      %v501 = vshll.u32 %v497, 16
      %v503 = vrot.slane %v501, 1
      %v504 = vor.u32 %v499, %v503
      %v506 = vsel %vm338, %v504, 0
      %508 = vmatpush.bf16.msra.mxu0 0
      %509 = vmatpush.bf16.msra.mxu0 0
      %510 = vmatpush.bf16.msra.mxu0 0
      %511 = vmatpush.bf16.msra.mxu0 0
      %512 = vmatpush.bf16.msra.mxu0 0
      %513 = vmatpush.bf16.msra.mxu0 0
      %514 = vmatpush.bf16.msra.mxu0 0
      %515 = vmatpush.bf16.msra.mxu0 %v416
      %516 = vmatmul.bf16.gmra.mxu0 %v506
      %v517 = vpop.f32.mrf.mxu0
      %v518 = vadd.f32 0.0, %v517
      %v519 = vpop.f32.mrf.mxu0
      %520 = vdwg.mxu0
      %v521 = vadd.f32 %v492, %v518
      %v522 = vrot.slane %v521, 4
      %v523 = vadd.f32 %v521, %v522
      %v524 = vrot.slane %v523, 2
      %v525 = vadd.f32 %v523, %v524
      %v526 = vrot.slane %v525, 1
      %v527 = vadd.f32 %v525, %v526
      %v528 = vadd.f32 %v441, %v527
      %v529 = vmul.f32 %v521, %v521
      %v530 = vrot.slane %v529, 4
      %v531 = vadd.f32 %v529, %v530
      %v532 = vrot.slane %v531, 2
      %v533 = vadd.f32 %v531, %v532
      %v534 = vrot.slane %v533, 1
      %v535 = vadd.f32 %v533, %v534
      %v536 = vadd.f32 %v449, %v535
      %537 = vmatpush.bf16.msra.mxu0 0
      %538 = vmatpush.bf16.msra.mxu0 0
      %539 = vmatpush.bf16.msra.mxu0 0
      %540 = vmatpush.bf16.msra.mxu0 0
      %541 = vmatpush.bf16.msra.mxu0 0
      %542 = vmatpush.bf16.msra.mxu0 0
      %543 = vmatpush.bf16.msra.mxu0 0
      %544 = vmatpush.bf16.msra.mxu0 %v336
      %545 = vmatmul.bf16.gmra.mxu0 %v506
      %v546 = vpop.f32.mrf.mxu0
      %v547 = vadd.f32 0.0, %v546
      %v548 = vpop.f32.mrf.mxu0
      %549 = vdwg.mxu0
      %550 = vmatpush.bf16.msra.mxu0 0
      %551 = vmatpush.bf16.msra.mxu0 0
      %552 = vmatpush.bf16.msra.mxu0 0
      %553 = vmatpush.bf16.msra.mxu0 0
      %554 = vmatpush.bf16.msra.mxu0 0
      %555 = vmatpush.bf16.msra.mxu0 0
      %556 = vmatpush.bf16.msra.mxu0 0
      %557 = vmatpush.bf16.msra.mxu0 %v359
      %558 = vmatmul.bf16.gmra.mxu0 %v477
      %v559 = vpop.f32.mrf.mxu0
      %v560 = vadd.f32 %v547, %v559
      %v561 = vpop.f32.mrf.mxu0
      %562 = vdwg.mxu0
      %v564 = vsel %vm338, %v297, 0
      %566 = vmatpush.bf16.msra.mxu0 0
      %567 = vmatpush.bf16.msra.mxu0 0
      %568 = vmatpush.bf16.msra.mxu0 0
      %569 = vmatpush.bf16.msra.mxu0 0
      %570 = vmatpush.bf16.msra.mxu0 0
      %571 = vmatpush.bf16.msra.mxu0 0
      %572 = vmatpush.bf16.msra.mxu0 0
      %573 = vmatpush.bf16.msra.mxu0 %v381
      %574 = vmatmul.bf16.gmra.mxu0 %v564
      %v575 = vpop.f32.mrf.mxu0
      %v576 = vadd.f32 0.0, %v575
      %v577 = vpop.f32.mrf.mxu0
      %578 = vdwg.mxu0
      %v579 = vadd.f32 %v560, %v576
      %v582 = vunpack.c.l.b16 %v297
      %v583 = vunpack.c.l.b16 %v298
      %v584 = vpack.c.b16 %v583, %v582
      %v586 = vshrl.u32 %v584, 16
      %v588 = vshll.u32 %v584, 16
      %v590 = vrot.slane %v588, 1
      %v591 = vor.u32 %v586, %v590
      %v593 = vsel %vm338, %v591, 0
      %595 = vmatpush.bf16.msra.mxu0 0
      %596 = vmatpush.bf16.msra.mxu0 0
      %597 = vmatpush.bf16.msra.mxu0 0
      %598 = vmatpush.bf16.msra.mxu0 0
      %599 = vmatpush.bf16.msra.mxu0 0
      %600 = vmatpush.bf16.msra.mxu0 0
      %601 = vmatpush.bf16.msra.mxu0 0
      %602 = vmatpush.bf16.msra.mxu0 %v416
      %603 = vmatmul.bf16.gmra.mxu0 %v593
      %v604 = vpop.f32.mrf.mxu0
      %v605 = vadd.f32 0.0, %v604
      %v606 = vpop.f32.mrf.mxu0
      %607 = vdwg.mxu0
      %v608 = vadd.f32 %v579, %v605
      %v609 = vrot.slane %v608, 4
      %v610 = vadd.f32 %v608, %v609
      %v611 = vrot.slane %v610, 2
      %v612 = vadd.f32 %v610, %v611
      %v613 = vrot.slane %v612, 1
      %v614 = vadd.f32 %v612, %v613
      %v615 = vadd.f32 %v528, %v614
      %v616 = vmul.f32 %v608, %v608
      %v617 = vrot.slane %v616, 4
      %v618 = vadd.f32 %v616, %v617
      %v619 = vrot.slane %v618, 2
      %v620 = vadd.f32 %v618, %v619
      %v621 = vrot.slane %v620, 1
      %v622 = vadd.f32 %v620, %v621
      %v623 = vadd.f32 %v536, %v622
      %624 = vmatpush.bf16.msra.mxu0 0
      %625 = vmatpush.bf16.msra.mxu0 0
      %626 = vmatpush.bf16.msra.mxu0 0
      %627 = vmatpush.bf16.msra.mxu0 0
      %628 = vmatpush.bf16.msra.mxu0 0
      %629 = vmatpush.bf16.msra.mxu0 0
      %630 = vmatpush.bf16.msra.mxu0 0
      %631 = vmatpush.bf16.msra.mxu0 %v336
      %632 = vmatmul.bf16.gmra.mxu0 %v593
      %v633 = vpop.f32.mrf.mxu0
      %v634 = vadd.f32 0.0, %v633
      %v635 = vpop.f32.mrf.mxu0
      %636 = vdwg.mxu0
      %637 = vmatpush.bf16.msra.mxu0 0
      %638 = vmatpush.bf16.msra.mxu0 0
      %639 = vmatpush.bf16.msra.mxu0 0
      %640 = vmatpush.bf16.msra.mxu0 0
      %641 = vmatpush.bf16.msra.mxu0 0
      %642 = vmatpush.bf16.msra.mxu0 0
      %643 = vmatpush.bf16.msra.mxu0 0
      %644 = vmatpush.bf16.msra.mxu0 %v359
      %645 = vmatmul.bf16.gmra.mxu0 %v564
      %v646 = vpop.f32.mrf.mxu0
      %v647 = vadd.f32 %v634, %v646
      %v648 = vpop.f32.mrf.mxu0
      %649 = vdwg.mxu0
      %v651 = vsel %vm338, %v299, 0
      %653 = vmatpush.bf16.msra.mxu0 0
      %654 = vmatpush.bf16.msra.mxu0 0
      %655 = vmatpush.bf16.msra.mxu0 0
      %656 = vmatpush.bf16.msra.mxu0 0
      %657 = vmatpush.bf16.msra.mxu0 0
      %658 = vmatpush.bf16.msra.mxu0 0
      %659 = vmatpush.bf16.msra.mxu0 0
      %660 = vmatpush.bf16.msra.mxu0 %v381
      %661 = vmatmul.bf16.gmra.mxu0 %v651
      %v662 = vpop.f32.mrf.mxu0
      %v663 = vadd.f32 0.0, %v662
      %v664 = vpop.f32.mrf.mxu0
      %665 = vdwg.mxu0
      %v666 = vadd.f32 %v647, %v663
      %v669 = vunpack.c.l.b16 %v299
      %v670 = vunpack.c.l.b16 %v300
      %v671 = vpack.c.b16 %v670, %v669
      %v673 = vshrl.u32 %v671, 16
      %v675 = vshll.u32 %v671, 16
      %v677 = vrot.slane %v675, 1
      %v678 = vor.u32 %v673, %v677
      %v680 = vsel %vm338, %v678, 0
      %682 = vmatpush.bf16.msra.mxu0 0
      %683 = vmatpush.bf16.msra.mxu0 0
      %684 = vmatpush.bf16.msra.mxu0 0
      %685 = vmatpush.bf16.msra.mxu0 0
      %686 = vmatpush.bf16.msra.mxu0 0
      %687 = vmatpush.bf16.msra.mxu0 0
      %688 = vmatpush.bf16.msra.mxu0 0
      %689 = vmatpush.bf16.msra.mxu0 %v416
      %690 = vmatmul.bf16.gmra.mxu0 %v680
      %v691 = vpop.f32.mrf.mxu0
      %v692 = vadd.f32 0.0, %v691
      %v693 = vpop.f32.mrf.mxu0
      %694 = vdwg.mxu0
      %v695 = vadd.f32 %v666, %v692
      %v696 = vrot.slane %v695, 4
      %v697 = vadd.f32 %v695, %v696
      %v698 = vrot.slane %v697, 2
      %v699 = vadd.f32 %v697, %v698
      %v700 = vrot.slane %v699, 1
      %v701 = vadd.f32 %v699, %v700
      %v702 = vadd.f32 %v615, %v701
      %v703 = vmul.f32 %v695, %v695
      %v704 = vrot.slane %v703, 4
      %v705 = vadd.f32 %v703, %v704
      %v706 = vrot.slane %v705, 2
      %v707 = vadd.f32 %v705, %v706
      %v708 = vrot.slane %v707, 1
      %v709 = vadd.f32 %v707, %v708
      %v710 = vadd.f32 %v623, %v709
      %711 = vmatpush.bf16.msra.mxu0 0
      %712 = vmatpush.bf16.msra.mxu0 0
      %713 = vmatpush.bf16.msra.mxu0 0
      %714 = vmatpush.bf16.msra.mxu0 0
      %715 = vmatpush.bf16.msra.mxu0 0
      %716 = vmatpush.bf16.msra.mxu0 0
      %717 = vmatpush.bf16.msra.mxu0 0
      %718 = vmatpush.bf16.msra.mxu0 %v336
      %719 = vmatmul.bf16.gmra.mxu0 %v680
      %v720 = vpop.f32.mrf.mxu0
      %v721 = vadd.f32 0.0, %v720
      %v722 = vpop.f32.mrf.mxu0
      %723 = vdwg.mxu0
      %724 = vmatpush.bf16.msra.mxu0 0
      %725 = vmatpush.bf16.msra.mxu0 0
      %726 = vmatpush.bf16.msra.mxu0 0
      %727 = vmatpush.bf16.msra.mxu0 0
      %728 = vmatpush.bf16.msra.mxu0 0
      %729 = vmatpush.bf16.msra.mxu0 0
      %730 = vmatpush.bf16.msra.mxu0 0
      %731 = vmatpush.bf16.msra.mxu0 %v359
      %732 = vmatmul.bf16.gmra.mxu0 %v651
      %v733 = vpop.f32.mrf.mxu0
      %v734 = vadd.f32 %v721, %v733
      %v735 = vpop.f32.mrf.mxu0
      %736 = vdwg.mxu0
      %v738 = vsel %vm338, %v301, 0
      %740 = vmatpush.bf16.msra.mxu0 0
      %741 = vmatpush.bf16.msra.mxu0 0
      %742 = vmatpush.bf16.msra.mxu0 0
      %743 = vmatpush.bf16.msra.mxu0 0
      %744 = vmatpush.bf16.msra.mxu0 0
      %745 = vmatpush.bf16.msra.mxu0 0
      %746 = vmatpush.bf16.msra.mxu0 0
      %747 = vmatpush.bf16.msra.mxu0 %v381
      %748 = vmatmul.bf16.gmra.mxu0 %v738
      %v749 = vpop.f32.mrf.mxu0
      %v750 = vadd.f32 0.0, %v749
      %v751 = vpop.f32.mrf.mxu0
      %752 = vdwg.mxu0
      %v753 = vadd.f32 %v734, %v750
      %v756 = vunpack.c.l.b16 %v301
      %v757 = vunpack.c.l.b16 %v302
      %v758 = vpack.c.b16 %v757, %v756
      %v760 = vshrl.u32 %v758, 16
      %v762 = vshll.u32 %v758, 16
      %v764 = vrot.slane %v762, 1
      %v765 = vor.u32 %v760, %v764
      %v767 = vsel %vm338, %v765, 0
      %769 = vmatpush.bf16.msra.mxu0 0
      %770 = vmatpush.bf16.msra.mxu0 0
      %771 = vmatpush.bf16.msra.mxu0 0
      %772 = vmatpush.bf16.msra.mxu0 0
      %773 = vmatpush.bf16.msra.mxu0 0
      %774 = vmatpush.bf16.msra.mxu0 0
      %775 = vmatpush.bf16.msra.mxu0 0
      %776 = vmatpush.bf16.msra.mxu0 %v416
      %777 = vmatmul.bf16.gmra.mxu0 %v767
      %v778 = vpop.f32.mrf.mxu0
      %v779 = vadd.f32 0.0, %v778
      %v780 = vpop.f32.mrf.mxu0
      %781 = vdwg.mxu0
      %v782 = vadd.f32 %v753, %v779
      %v783 = vrot.slane %v782, 4
      %v784 = vadd.f32 %v782, %v783
      %v785 = vrot.slane %v784, 2
      %v786 = vadd.f32 %v784, %v785
      %v787 = vrot.slane %v786, 1
      %v788 = vadd.f32 %v786, %v787
      %v789 = vadd.f32 %v702, %v788
      %v790 = vmul.f32 %v782, %v782
      %v791 = vrot.slane %v790, 4
      %v792 = vadd.f32 %v790, %v791
      %v793 = vrot.slane %v792, 2
      %v794 = vadd.f32 %v792, %v793
      %v795 = vrot.slane %v794, 1
      %v796 = vadd.f32 %v794, %v795
      %v797 = vadd.f32 %v710, %v796
      %798 = vmatpush.bf16.msra.mxu0 0
      %799 = vmatpush.bf16.msra.mxu0 0
      %800 = vmatpush.bf16.msra.mxu0 0
      %801 = vmatpush.bf16.msra.mxu0 0
      %802 = vmatpush.bf16.msra.mxu0 0
      %803 = vmatpush.bf16.msra.mxu0 0
      %804 = vmatpush.bf16.msra.mxu0 0
      %805 = vmatpush.bf16.msra.mxu0 %v336
      %806 = vmatmul.bf16.gmra.mxu0 %v767
      %v807 = vpop.f32.mrf.mxu0
      %v808 = vadd.f32 0.0, %v807
      %v809 = vpop.f32.mrf.mxu0
      %810 = vdwg.mxu0
      %811 = vmatpush.bf16.msra.mxu0 0
      %812 = vmatpush.bf16.msra.mxu0 0
      %813 = vmatpush.bf16.msra.mxu0 0
      %814 = vmatpush.bf16.msra.mxu0 0
      %815 = vmatpush.bf16.msra.mxu0 0
      %816 = vmatpush.bf16.msra.mxu0 0
      %817 = vmatpush.bf16.msra.mxu0 0
      %818 = vmatpush.bf16.msra.mxu0 %v359
      %819 = vmatmul.bf16.gmra.mxu0 %v738
      %v820 = vpop.f32.mrf.mxu0
      %v821 = vadd.f32 %v808, %v820
      %v822 = vpop.f32.mrf.mxu0
      %823 = vdwg.mxu0
      %v825 = vsel %vm338, %v303, 0
      %827 = vmatpush.bf16.msra.mxu0 0
      %828 = vmatpush.bf16.msra.mxu0 0
      %829 = vmatpush.bf16.msra.mxu0 0
      %830 = vmatpush.bf16.msra.mxu0 0
      %831 = vmatpush.bf16.msra.mxu0 0
      %832 = vmatpush.bf16.msra.mxu0 0
      %833 = vmatpush.bf16.msra.mxu0 0
      %834 = vmatpush.bf16.msra.mxu0 %v381
      %835 = vmatmul.bf16.gmra.mxu0 %v825
      %v836 = vpop.f32.mrf.mxu0
      %v837 = vadd.f32 0.0, %v836
      %v838 = vpop.f32.mrf.mxu0
      %839 = vdwg.mxu0
      %v840 = vadd.f32 %v821, %v837
      %v843 = vunpack.c.l.b16 %v303
      %v844 = vunpack.c.l.b16 %v304
      %v845 = vpack.c.b16 %v844, %v843
      %v847 = vshrl.u32 %v845, 16
      %v849 = vshll.u32 %v845, 16
      %v851 = vrot.slane %v849, 1
      %v852 = vor.u32 %v847, %v851
      %v854 = vsel %vm338, %v852, 0
      %856 = vmatpush.bf16.msra.mxu0 0
      %857 = vmatpush.bf16.msra.mxu0 0
      %858 = vmatpush.bf16.msra.mxu0 0
      %859 = vmatpush.bf16.msra.mxu0 0
      %860 = vmatpush.bf16.msra.mxu0 0
      %861 = vmatpush.bf16.msra.mxu0 0
      %862 = vmatpush.bf16.msra.mxu0 0
      %863 = vmatpush.bf16.msra.mxu0 %v416
      %864 = vmatmul.bf16.gmra.mxu0 %v854
      %v865 = vpop.f32.mrf.mxu0
      %v866 = vadd.f32 0.0, %v865
      %v867 = vpop.f32.mrf.mxu0
      %868 = vdwg.mxu0
      %v869 = vadd.f32 %v840, %v866
      %v870 = vrot.slane %v869, 4
      %v871 = vadd.f32 %v869, %v870
      %v872 = vrot.slane %v871, 2
      %v873 = vadd.f32 %v871, %v872
      %v874 = vrot.slane %v873, 1
      %v875 = vadd.f32 %v873, %v874
      %v876 = vadd.f32 %v789, %v875
      %v877 = vmul.f32 %v869, %v869
      %v878 = vrot.slane %v877, 4
      %v879 = vadd.f32 %v877, %v878
      %v880 = vrot.slane %v879, 2
      %v881 = vadd.f32 %v879, %v880
      %v882 = vrot.slane %v881, 1
      %v883 = vadd.f32 %v881, %v882
      %v884 = vadd.f32 %v797, %v883
      %885 = vmatpush.bf16.msra.mxu0 0
      %886 = vmatpush.bf16.msra.mxu0 0
      %887 = vmatpush.bf16.msra.mxu0 0
      %888 = vmatpush.bf16.msra.mxu0 0
      %889 = vmatpush.bf16.msra.mxu0 0
      %890 = vmatpush.bf16.msra.mxu0 0
      %891 = vmatpush.bf16.msra.mxu0 0
      %892 = vmatpush.bf16.msra.mxu0 %v336
      %893 = vmatmul.bf16.gmra.mxu0 %v854
      %v894 = vpop.f32.mrf.mxu0
      %v895 = vadd.f32 0.0, %v894
      %v896 = vpop.f32.mrf.mxu0
      %897 = vdwg.mxu0
      %898 = vmatpush.bf16.msra.mxu0 0
      %899 = vmatpush.bf16.msra.mxu0 0
      %900 = vmatpush.bf16.msra.mxu0 0
      %901 = vmatpush.bf16.msra.mxu0 0
      %902 = vmatpush.bf16.msra.mxu0 0
      %903 = vmatpush.bf16.msra.mxu0 0
      %904 = vmatpush.bf16.msra.mxu0 0
      %905 = vmatpush.bf16.msra.mxu0 %v359
      %906 = vmatmul.bf16.gmra.mxu0 %v825
      %v907 = vpop.f32.mrf.mxu0
      %v908 = vadd.f32 %v895, %v907
      %v909 = vpop.f32.mrf.mxu0
      %910 = vdwg.mxu0
      %v912 = vsel %vm338, %v305, 0
      %914 = vmatpush.bf16.msra.mxu0 0
      %915 = vmatpush.bf16.msra.mxu0 0
      %916 = vmatpush.bf16.msra.mxu0 0
      %917 = vmatpush.bf16.msra.mxu0 0
      %918 = vmatpush.bf16.msra.mxu0 0
      %919 = vmatpush.bf16.msra.mxu0 0
      %920 = vmatpush.bf16.msra.mxu0 0
      %921 = vmatpush.bf16.msra.mxu0 %v381
      %922 = vmatmul.bf16.gmra.mxu0 %v912
      %v923 = vpop.f32.mrf.mxu0
      %v924 = vadd.f32 0.0, %v923
      %v925 = vpop.f32.mrf.mxu0
      %926 = vdwg.mxu0
      %v927 = vadd.f32 %v908, %v924
      %v930 = vunpack.c.l.b16 %v305
      %v931 = vunpack.c.l.b16 %v306
      %v932 = vpack.c.b16 %v931, %v930
      %v934 = vshrl.u32 %v932, 16
      %v936 = vshll.u32 %v932, 16
      %v938 = vrot.slane %v936, 1
      %v939 = vor.u32 %v934, %v938
      %v941 = vsel %vm338, %v939, 0
      %943 = vmatpush.bf16.msra.mxu0 0
      %944 = vmatpush.bf16.msra.mxu0 0
      %945 = vmatpush.bf16.msra.mxu0 0
      %946 = vmatpush.bf16.msra.mxu0 0
      %947 = vmatpush.bf16.msra.mxu0 0
      %948 = vmatpush.bf16.msra.mxu0 0
      %949 = vmatpush.bf16.msra.mxu0 0
      %950 = vmatpush.bf16.msra.mxu0 %v416
      %951 = vmatmul.bf16.gmra.mxu0 %v941
      %v952 = vpop.f32.mrf.mxu0
      %v953 = vadd.f32 0.0, %v952
      %v954 = vpop.f32.mrf.mxu0
      %955 = vdwg.mxu0
      %v956 = vadd.f32 %v927, %v953
      %v957 = vrot.slane %v956, 4
      %v958 = vadd.f32 %v956, %v957
      %v959 = vrot.slane %v958, 2
      %v960 = vadd.f32 %v958, %v959
      %v961 = vrot.slane %v960, 1
      %v962 = vadd.f32 %v960, %v961
      %v963 = vadd.f32 %v876, %v962
      %v964 = vmul.f32 %v956, %v956
      %v965 = vrot.slane %v964, 4
      %v966 = vadd.f32 %v964, %v965
      %v967 = vrot.slane %v966, 2
      %v968 = vadd.f32 %v966, %v967
      %v969 = vrot.slane %v968, 1
      %v970 = vadd.f32 %v968, %v969
      %v971 = vadd.f32 %v884, %v970
      %972 = vmatpush.bf16.msra.mxu0 0
      %973 = vmatpush.bf16.msra.mxu0 0
      %974 = vmatpush.bf16.msra.mxu0 0
      %975 = vmatpush.bf16.msra.mxu0 0
      %976 = vmatpush.bf16.msra.mxu0 0
      %977 = vmatpush.bf16.msra.mxu0 0
      %978 = vmatpush.bf16.msra.mxu0 0
      %979 = vmatpush.bf16.msra.mxu0 %v336
      %980 = vmatmul.bf16.gmra.mxu0 %v941
      %v981 = vpop.f32.mrf.mxu0
      %v982 = vadd.f32 0.0, %v981
      %v983 = vpop.f32.mrf.mxu0
      %984 = vdwg.mxu0
      %985 = vmatpush.bf16.msra.mxu0 0
      %986 = vmatpush.bf16.msra.mxu0 0
      %987 = vmatpush.bf16.msra.mxu0 0
      %988 = vmatpush.bf16.msra.mxu0 0
      %989 = vmatpush.bf16.msra.mxu0 0
      %990 = vmatpush.bf16.msra.mxu0 0
      %991 = vmatpush.bf16.msra.mxu0 0
      %992 = vmatpush.bf16.msra.mxu0 %v359
      %993 = vmatmul.bf16.gmra.mxu0 %v912
      %v994 = vpop.f32.mrf.mxu0
      %v995 = vadd.f32 %v982, %v994
      %v996 = vpop.f32.mrf.mxu0
      %997 = vdwg.mxu0
      %v999 = vsel %vm338, %v307, 0
      %1001 = vmatpush.bf16.msra.mxu0 0
      %1002 = vmatpush.bf16.msra.mxu0 0
      %1003 = vmatpush.bf16.msra.mxu0 0
      %1004 = vmatpush.bf16.msra.mxu0 0
      %1005 = vmatpush.bf16.msra.mxu0 0
      %1006 = vmatpush.bf16.msra.mxu0 0
      %1007 = vmatpush.bf16.msra.mxu0 0
      %1008 = vmatpush.bf16.msra.mxu0 %v381
      %1009 = vmatmul.bf16.gmra.mxu0 %v999
      %v1010 = vpop.f32.mrf.mxu0
      %v1011 = vadd.f32 0.0, %v1010
      %v1012 = vpop.f32.mrf.mxu0
      %1013 = vdwg.mxu0
      %v1014 = vadd.f32 %v995, %v1011
      %v1017 = vunpack.c.l.b16 %v307
      %v1018 = vunpack.c.l.b16 %v308
      %v1019 = vpack.c.b16 %v1018, %v1017
      %v1021 = vshrl.u32 %v1019, 16
      %v1023 = vshll.u32 %v1019, 16
      %v1025 = vrot.slane %v1023, 1
      %v1026 = vor.u32 %v1021, %v1025
      %v1028 = vsel %vm338, %v1026, 0
      %1030 = vmatpush.bf16.msra.mxu0 0
      %1031 = vmatpush.bf16.msra.mxu0 0
      %1032 = vmatpush.bf16.msra.mxu0 0
      %1033 = vmatpush.bf16.msra.mxu0 0
      %1034 = vmatpush.bf16.msra.mxu0 0
      %1035 = vmatpush.bf16.msra.mxu0 0
      %1036 = vmatpush.bf16.msra.mxu0 0
      %1037 = vmatpush.bf16.msra.mxu0 %v416
      %1038 = vmatmul.bf16.gmra.mxu0 %v1028
      %v1039 = vpop.f32.mrf.mxu0
      %v1040 = vadd.f32 0.0, %v1039
      %v1041 = vpop.f32.mrf.mxu0
      %1042 = vdwg.mxu0
      %v1043 = vadd.f32 %v1014, %v1040
      %v1044 = vrot.slane %v1043, 4
      %v1045 = vadd.f32 %v1043, %v1044
      %v1046 = vrot.slane %v1045, 2
      %v1047 = vadd.f32 %v1045, %v1046
      %v1048 = vrot.slane %v1047, 1
      %v1049 = vadd.f32 %v1047, %v1048
      %v1050 = vadd.f32 %v963, %v1049
      %v1051 = vmul.f32 %v1043, %v1043
      %v1052 = vrot.slane %v1051, 4
      %v1053 = vadd.f32 %v1051, %v1052
      %v1054 = vrot.slane %v1053, 2
      %v1055 = vadd.f32 %v1053, %v1054
      %v1056 = vrot.slane %v1055, 1
      %v1057 = vadd.f32 %v1055, %v1056
      %v1058 = vadd.f32 %v971, %v1057
      %1059 = vst [vmem:[%s177] sm:$0xff] %v434
      %1060 = vst [vmem:[%s177 + $0x8] sm:$0xff] %v521
      %1061 = vst [vmem:[%s177 + $0x10] sm:$0xff] %v608
      %1062 = vst [vmem:[%s177 + $0x18] sm:$0xff] %v695
      %1063 = vst [vmem:[%s177 + $0x20] sm:$0xff] %v782
      %1064 = vst [vmem:[%s177 + $0x28] sm:$0xff] %v869
      %1065 = vst [vmem:[%s177 + $0x30] sm:$0xff] %v956
      %1066 = vst [vmem:[%s177 + $0x38] sm:$0xff] %v1043
      %1067 = vst [vmem:[%s181] sm:$0x1] %v1050
      %1068 = vst [vmem:[%s181 + $0x1] sm:$0x1] %v1058
      %p1069 = scmp.lt.s32.totalorder %s15, 1
      %s1070 = scalar_select %p1069, %s15, 1
      %s1071 = smul.addr %s1070, 8
      %s1072 = smul.addr %s1071, 8
      %s1073 = scalar_lea.vmem %s2, %s1072
      %p1074 = scmp.lt.s32.totalorder %s15, 1
      %s1075 = scalar_select %p1074, %s15, 1
      %s1076 = smul.addr %s1075, 2
      %s1077 = scalar_lea.vmem %s3, %s1076
      // Predicated region
      $region29: #{downblock_forward.2} parent=27 // pred_check
        %p1078 = pneg %p80
      $region30: #{downblock_forward.2} parent=27 // pred_check_branch
        %1080 = sbr.rel (%p1078) target = $region32
      $region31: #{downblock_forward.2} parent=27 // pred_region
        _
      $region32: #{downblock_forward.2} parent=27 // pred_fallthru
        _
      // Predicated region
      $region33: #{downblock_forward.2} parent=27 // pred_check
        %p1081 = pneg %p106
      $region34: #{downblock_forward.2} parent=27 // pred_check_branch
        %1083 = sbr.rel (%p1081) target = $region36
      $region35: #{downblock_forward.2} parent=27 // pred_region
        _
      $region36: #{downblock_forward.2} parent=27 // pred_fallthru
        _
    $region28: #{downblock_forward.2} parent=5 // pred_fallthru
      _
    %p1084 = scmp.le.s32.totalorder 2, %s10
    // Predicated region
    $region37: #{downblock_forward.2} parent=5 // pred_check
      %p1085 = pneg %p1084
    $region38: #{downblock_forward.2} parent=5 // pred_check_branch
      %1087 = sbr.rel (%p1085) target = $region40
    $region39: #{downblock_forward.2} parent=5 // pred_region
      %s1088 = ssub.s32 %s10, 2
      // Predicated region
      $region41: #{downblock_forward.2} parent=39 // pred_check
        %p1089 = pneg %p86
      $region42: #{downblock_forward.2} parent=39 // pred_check_branch
        %1091 = sbr.rel (%p1089) target = $region44
      $region43: #{downblock_forward.2} parent=39 // pred_region
        %p1092 = scmp.lt.s32.totalorder %s16, 1
        %s1093 = scalar_select %p1092, %s16, 1
        %s1094 = smul.addr %s1093, 8
        %s1095 = smul.addr %s1094, 8
        %s1096 = scalar_lea.vmem %s2, %s1095
      $region44: #{downblock_forward.2} parent=39 // pred_fallthru
        _
      // Predicated region
      $region45: #{downblock_forward.2} parent=39 // pred_check
        %p1097 = pneg %p112
      $region46: #{downblock_forward.2} parent=39 // pred_check_branch
        %1099 = sbr.rel (%p1097) target = $region48
      $region47: #{downblock_forward.2} parent=39 // pred_region
        %p1100 = scmp.lt.s32.totalorder %s16, 1
        %s1101 = scalar_select %p1100, %s16, 1
        %s1102 = smul.addr %s1101, 2
        %s1103 = scalar_lea.vmem %s3, %s1102
      $region48: #{downblock_forward.2} parent=39 // pred_fallthru
        _
    $region40: #{downblock_forward.2} parent=5 // pred_fallthru
      _
  $region6: #{downblock_forward.2} parent=0 // loop_footer
    %s14 = sadd.s32 1, %s10
  $region7: #{downblock_forward.2} parent=0 // loop_footer_branch
    %9 = sbr.rel target = $region3
  $region8: #{downblock_forward.2} parent=0 // loop_exit
    _

</llo_original>
